<compile_context>
chip_gen: v5e
topology: v5e:2x2
jax: 0.10.0
libtpu: 0.0.40
codegen_flags: <defaults>
</compile_context>

<pallas_src>
import functools

import jax
import jax.numpy as jnp
from jax.experimental import pallas as pl
from jax.experimental.pallas import tpu as pltpu

_INV_SQRT2 = 0.7071067811865476


def _round_up(x, m):
    return (x + m - 1) // m * m


def _erf(x):
    # Abramowitz & Stegun 7.1.26 rational approximation (max abs err ~1.5e-7).
    # The 1/(1+p*|x|) uses the EUP approximate reciprocal (otherwise-idle slot) plus
    # one Newton step to restore ~f32 accuracy.
    a1, a2, a3, a4, a5 = (0.254829592, -0.284496736, 1.421413741,
                          -1.453152027, 1.061405429)
    p = 0.3275911
    s = jnp.sign(x)
    ax = jnp.abs(x)
    d = 1.0 + p * ax
    t = pl.reciprocal(d, approx=True)
    t = t * (2.0 - d * t)                 # one NR refinement
    poly = ((((a5 * t + a4) * t + a3) * t + a2) * t + a1) * t
    return s * (1.0 - poly * jnp.exp(-ax * ax))


def _gelu_exact(x):
    return 0.5 * x * (1.0 + _erf(x * _INV_SQRT2))


def conv_stats_kernel(x_ref, w_ref, m_ref, y_ref, st_ref, *, Wp, R_blk):
    # x_ref : (R_x, Cin)      whole zero-padded, row-flattened batch (VMEM resident)
    # w_ref : (9*Cin, Cp)     folded conv taps, out-channels zero-padded to Cp lanes
    # m_ref : (1, R_blk)      1.0 on valid output rows of this tile, 0.0 elsewhere
    # y_ref : (R_blk, Cp)     raw conv output rows for this tile (lane dense)
    # st_ref: (2, Cp)         per-tile [channel sum ; channel sum of squares]
    base = pl.multiple_of(pl.program_id(0) * R_blk, 8)

    # Fold the 9 taps into the contraction: (R_blk, 9*Cin) @ (9*Cin, Cp) in ONE dot.
    cols = [x_ref[pl.ds(base + di * Wp + dj, R_blk), :]
            for di in range(3) for dj in range(3)]
    slab = jnp.concatenate(cols, axis=-1)
    y = jnp.dot(slab, w_ref[...], preferred_element_type=jnp.float32)
    y_ref[...] = y

    # Per-tile BN partial statistics on the MXU (masked ones-row dots); junk rows
    # (image/row padding, tile tail) are zeroed out by the mask.
    m = m_ref[...]
    st_ref[0:1, :] = jnp.dot(m, y, preferred_element_type=jnp.float32)
    st_ref[1:2, :] = jnp.dot(m, y * y, preferred_element_type=jnp.float32)


def bn_gelu_kernel(y_ref, scale_ref, shift_ref, o_ref):
    # y: (R_blk, Cp) raw conv rows; scale/shift: (1, Cp) per-channel BN affine.
    z = y_ref[...] * scale_ref[...] + shift_ref[...]
    o_ref[...] = _gelu_exact(z).astype(o_ref.dtype)


def conv_block(x, w, b, gamma, beta, *, eps=1e-5):
    """x: [N, C_in, H, W] float32 (PyTorch NCHW). Returns [N, C_out, H, W] float32."""
    del b  # conv bias is exactly cancelled by the training-mode BN mean subtraction
    N, Cin, H, W = x.shape
    Cout, Cin_w, kh, kw = w.shape
    assert (kh, kw) == (3, 3) and Cin_w == Cin
    Wp = W + 2
    B = (H + 2) * Wp                      # flattened rows per zero-padded image
    Cp = _round_up(Cout, 128)             # lane-dense output channel width

    # Fold N into the row axis; tile the rows into ~512-row chunks.
    T = N * B                             # total (junk-inclusive) output rows
    n_chunks = -(-T // 512)
    R_blk = _round_up(-(-T // n_chunks), 128)
    R_pad = n_chunks * R_blk
    R_x = _round_up(R_pad + 2 * Wp + 2, 8)   # input rows incl. tap slack

    # --- glue: NCHW -> zero-padded NHWC, row-flattened over the whole batch --------
    xf = jnp.pad(x.transpose(0, 2, 3, 1).astype(jnp.float32),
                 ((0, 0), (1, 1), (1, 1), (0, 0)))        # (N, H+2, Wp, Cin)
    xf = xf.reshape(N * B, Cin)
    xf = jnp.pad(xf, ((0, R_x - N * B), (0, 0)))

    # Folded taps: w2[(di*3+dj)*Cin + ci, co] = w[co, ci, di, dj]; channels -> Cp.
    w2 = w.transpose(2, 3, 1, 0).reshape(kh * kw * Cin, Cout).astype(jnp.float32)
    w2 = jnp.pad(w2, ((0, 0), (0, Cp - Cout)))

    # Valid-output-row mask in the B-stride layout: row r -> (i = rem//Wp, j = rem%Wp)
    # is a real pixel iff i < H and j < W (and r < T).
    r = jnp.arange(R_pad)
    rem = r % B
    mask = ((r < T) & (rem // Wp < H) & (rem % Wp < W)).astype(jnp.float32)
    mask = mask.reshape(1, R_pad)

    # --- pass 1: implicit conv + per-tile BN partial stats --------------------------
    y, part = pl.pallas_call(
        functools.partial(conv_stats_kernel, Wp=Wp, R_blk=R_blk),
        out_shape=(jax.ShapeDtypeStruct((R_pad, Cp), jnp.float32),
                   jax.ShapeDtypeStruct((n_chunks, 2, Cp), jnp.float32)),
        grid=(n_chunks,),
        in_specs=[
            pl.BlockSpec((R_x, Cin), lambda i: (0, 0)),             # whole padded input
            pl.BlockSpec((kh * kw * Cin, Cp), lambda i: (0, 0)),    # folded weights
            pl.BlockSpec((1, R_blk), lambda i: (0, i)),             # valid-row mask
        ],
        out_specs=(
            pl.BlockSpec((R_blk, Cp), lambda i: (i, 0)),            # raw conv rows
            pl.BlockSpec((None, 2, Cp), lambda i: (i, 0, 0)),       # per-tile stats
        ),
        compiler_params=pltpu.CompilerParams(
            dimension_semantics=("parallel",)),
    )(xf, w2, mask)

    # --- tiny glue: combine partials -> per-channel BN affine -----------------------
    # Per-tile partials + one pairwise sum keeps accumulation error bounded vs. a long
    # serial f32 chain.  Single-pass variance is fine at this scale (see TODO).
    # TODO(synk): switch to a shifted/two-pass variance for very large N*H*W.
    s = jnp.sum(part, axis=0)                                   # (2, Cp)
    count = float(N * H * W)
    mean = s[0] / count
    var = s[1] / count - mean * mean                            # biased var (BN fwd)
    inv_std = jax.lax.rsqrt(var + eps)
    g_pad = jnp.pad(gamma.astype(jnp.float32), (0, Cp - Cout))
    bt_pad = jnp.pad(beta.astype(jnp.float32), (0, Cp - Cout))
    scale = (g_pad * inv_std).reshape(1, Cp)
    shift = (bt_pad - mean * g_pad * inv_std).reshape(1, Cp)

    # --- pass 2: BN affine + exact GELU (no conv recompute) -------------------------
    out = pl.pallas_call(
        bn_gelu_kernel,
        out_shape=jax.ShapeDtypeStruct((R_pad, Cp), jnp.float32),
        grid=(n_chunks,),
        in_specs=[
            pl.BlockSpec((R_blk, Cp), lambda i: (i, 0)),
            pl.BlockSpec((1, Cp), lambda i: (0, 0)),
            pl.BlockSpec((1, Cp), lambda i: (0, 0)),
        ],
        out_specs=pl.BlockSpec((R_blk, Cp), lambda i: (i, 0)),
        compiler_params=pltpu.CompilerParams(
            dimension_semantics=("parallel",)),
    )(y, scale, shift)

    # --- glue: drop junk rows / padded channels, back to NCHW -----------------------
    out = out[:N * B].reshape(N, H + 2, Wp, Cp)[:, :H, :W, :Cout]
    return out.transpose(0, 3, 1, 2)


def _reference(x, w, b, gamma, beta, eps=1e-5):
    y = jax.lax.conv_general_dilated(
        x, w, window_strides=(1, 1), padding=((1, 1), (1, 1)),
        dimension_numbers=("NCHW", "OIHW", "NCHW"))
    y = y + b[None, :, None, None]
    mean = y.mean(axis=(0, 2, 3), keepdims=True)
    var = y.var(axis=(0, 2, 3), keepdims=True)   # biased, like BN forward
    z = (y - mean) / jnp.sqrt(var + eps)
    z = z * gamma[None, :, None, None] + beta[None, :, None, None]
    return jax.nn.gelu(z, approximate=False)


if __name__ == "__main__":
    key = jax.random.PRNGKey(0)
    k_x, k_w, k_b, k_g, k_bt = jax.random.split(key, 5)

    N, Cin, H, W = 2, 4, 16, 16
    Cout, ksz = 8, 3

    x = jax.random.normal(k_x, (N, Cin, H, W), dtype=jnp.float32)
    w = jax.random.normal(k_w, (Cout, Cin, ksz, ksz), dtype=jnp.float32) * 0.2
    b = jax.random.normal(k_b, (Cout,), dtype=jnp.float32) * 0.1
    gamma = 1.0 + 0.1 * jax.random.normal(k_g, (Cout,), dtype=jnp.float32)
    beta = 0.1 * jax.random.normal(k_bt, (Cout,), dtype=jnp.float32)

    out = conv_block(x, w, b, gamma, beta)
    out = jax.block_until_ready(out)

    ref = _reference(x, w, b, gamma, beta)
    assert out.shape == (N, Cout, H, W), out.shape
    err = float(jnp.max(jnp.abs(out - ref)))
    assert jnp.allclose(out, ref, atol=1e-4, rtol=1e-4), err

    print("KERNEL_OK")
</pallas_src>

<mosaic_0001>
module attributes {stable_mosaic.version = 11 : i64} {
  func.func @conv_stats_kernel(%arg0: i32, %arg1: memref<808x4xf32, #tpu.memory_space<vmem>>, %arg2: memref<36x128xf32, #tpu.memory_space<vmem>>, %arg3: memref<1x384xf32, #tpu.memory_space<vmem>>, %arg4: memref<384x128xf32, #tpu.memory_space<vmem>>, %arg5: memref<1x2x128xf32, #tpu.memory_space<vmem>>) attributes {dimension_semantics = [#tpu.dimension_semantics<parallel>], iteration_bounds = array<i64: 2>, scalar_prefetch = 0 : i64, scratch_operands = 0 : i64, tpu.core_type = #tpu.core_type<tc>, window_params = [{pipeline_mode = #tpu.pipeline_mode<synchronous>, transform_indices = @transform_0, window_bounds = array<i64: 808, 4>}, {pipeline_mode = #tpu.pipeline_mode<synchronous>, transform_indices = @transform_1, window_bounds = array<i64: 36, 128>}, {transform_indices = @transform_2, window_bounds = array<i64: 1, 384>}, {transform_indices = @transform_3, window_bounds = array<i64: 384, 128>}, {transform_indices = @transform_4, window_bounds = array<i64: 1, 2, 128>}]} {
    %c384_i32 = arith.constant 384 : i32
    %0 = arith.muli %arg0, %c384_i32 : i32
    %1 = tpu.assume_multiple %0, 8 : i32
    %c0_i32 = arith.constant 0 : i32
    %2 = arith.addi %1, %c0_i32 : i32
    %c0_i32_0 = arith.constant 0 : i32
    %3 = arith.addi %2, %c0_i32_0 : i32
    %4 = arith.index_cast %3 : i32 to index
    %c0 = arith.constant 0 : index
    %5 = vector.load %arg1[%4, %c0] : memref<808x4xf32, #tpu.memory_space<vmem>>, vector<384x4xf32>
    %c0_i32_1 = arith.constant 0 : i32
    %6 = arith.addi %1, %c0_i32_1 : i32
    %c1_i32 = arith.constant 1 : i32
    %7 = arith.addi %6, %c1_i32 : i32
    %8 = arith.index_cast %7 : i32 to index
    %c0_2 = arith.constant 0 : index
    %9 = vector.load %arg1[%8, %c0_2] : memref<808x4xf32, #tpu.memory_space<vmem>>, vector<384x4xf32>
    %c0_i32_3 = arith.constant 0 : i32
    %10 = arith.addi %1, %c0_i32_3 : i32
    %c2_i32 = arith.constant 2 : i32
    %11 = arith.addi %10, %c2_i32 : i32
    %12 = arith.index_cast %11 : i32 to index
    %c0_4 = arith.constant 0 : index
    %13 = vector.load %arg1[%12, %c0_4] : memref<808x4xf32, #tpu.memory_space<vmem>>, vector<384x4xf32>
    %c18_i32 = arith.constant 18 : i32
    %14 = arith.addi %1, %c18_i32 : i32
    %c0_i32_5 = arith.constant 0 : i32
    %15 = arith.addi %14, %c0_i32_5 : i32
    %16 = arith.index_cast %15 : i32 to index
    %c0_6 = arith.constant 0 : index
    %17 = vector.load %arg1[%16, %c0_6] : memref<808x4xf32, #tpu.memory_space<vmem>>, vector<384x4xf32>
    %c18_i32_7 = arith.constant 18 : i32
    %18 = arith.addi %1, %c18_i32_7 : i32
    %c1_i32_8 = arith.constant 1 : i32
    %19 = arith.addi %18, %c1_i32_8 : i32
    %20 = arith.index_cast %19 : i32 to index
    %c0_9 = arith.constant 0 : index
    %21 = vector.load %arg1[%20, %c0_9] : memref<808x4xf32, #tpu.memory_space<vmem>>, vector<384x4xf32>
    %c18_i32_10 = arith.constant 18 : i32
    %22 = arith.addi %1, %c18_i32_10 : i32
    %c2_i32_11 = arith.constant 2 : i32
    %23 = arith.addi %22, %c2_i32_11 : i32
    %24 = arith.index_cast %23 : i32 to index
    %c0_12 = arith.constant 0 : index
    %25 = vector.load %arg1[%24, %c0_12] : memref<808x4xf32, #tpu.memory_space<vmem>>, vector<384x4xf32>
    %c36_i32 = arith.constant 36 : i32
    %26 = arith.addi %1, %c36_i32 : i32
    %c0_i32_13 = arith.constant 0 : i32
    %27 = arith.addi %26, %c0_i32_13 : i32
    %28 = arith.index_cast %27 : i32 to index
    %c0_14 = arith.constant 0 : index
    %29 = vector.load %arg1[%28, %c0_14] : memref<808x4xf32, #tpu.memory_space<vmem>>, vector<384x4xf32>
    %c36_i32_15 = arith.constant 36 : i32
    %30 = arith.addi %1, %c36_i32_15 : i32
    %c1_i32_16 = arith.constant 1 : i32
    %31 = arith.addi %30, %c1_i32_16 : i32
    %32 = arith.index_cast %31 : i32 to index
    %c0_17 = arith.constant 0 : index
    %33 = vector.load %arg1[%32, %c0_17] : memref<808x4xf32, #tpu.memory_space<vmem>>, vector<384x4xf32>
    %c36_i32_18 = arith.constant 36 : i32
    %34 = arith.addi %1, %c36_i32_18 : i32
    %c2_i32_19 = arith.constant 2 : i32
    %35 = arith.addi %34, %c2_i32_19 : i32
    %36 = arith.index_cast %35 : i32 to index
    %c0_20 = arith.constant 0 : index
    %37 = vector.load %arg1[%36, %c0_20] : memref<808x4xf32, #tpu.memory_space<vmem>>, vector<384x4xf32>
    %38 = tpu.concatenate %5, %9, %13, %17, %21, %25, %29, %33, %37 in 1 : vector<384x4xf32>, vector<384x4xf32>, vector<384x4xf32>, vector<384x4xf32>, vector<384x4xf32>, vector<384x4xf32>, vector<384x4xf32>, vector<384x4xf32>, vector<384x4xf32> -> vector<384x36xf32>
    %c0_21 = arith.constant 0 : index
    %c0_22 = arith.constant 0 : index
    %39 = vector.load %arg2[%c0_21, %c0_22] : memref<36x128xf32, #tpu.memory_space<vmem>>, vector<36x128xf32>
    %cst = arith.constant dense<0.000000e+00> : vector<384x128xf32>
    %40 = tpu.matmul %38, %39, %cst {dimension_numbers = #tpu.dot_dimension_numbers<[1], [0], [0], [1], [0, 0, 1, 1], [], []>} : vector<384x36xf32>, vector<36x128xf32>, vector<384x128xf32> -> vector<384x128xf32>
    %c0_23 = arith.constant 0 : index
    %c0_24 = arith.constant 0 : index
    %41 = vector.load %arg4[%c0_23, %c0_24] : memref<384x128xf32, #tpu.memory_space<vmem>>, vector<384x128xf32>
    tpu.vector_store %arg4[%c0_23, %c0_24], %40 {strides = array<i32>} : memref<384x128xf32, #tpu.memory_space<vmem>>, vector<384x128xf32>,
    %c0_25 = arith.constant 0 : index
    %c0_26 = arith.constant 0 : index
    %42 = vector.load %arg3[%c0_25, %c0_26] : memref<1x384xf32, #tpu.memory_space<vmem>>, vector<1x384xf32>
    %cst_27 = arith.constant dense<0.000000e+00> : vector<1x128xf32>
    %43 = tpu.matmul %42, %40, %cst_27 {dimension_numbers = #tpu.dot_dimension_numbers<[1], [0], [0], [1], [0, 0, 1, 1], [], []>} : vector<1x384xf32>, vector<384x128xf32>, vector<1x128xf32> -> vector<1x128xf32>
    %c0_28 = arith.constant 0 : index
    %c0_29 = arith.constant 0 : index
    %c0_30 = arith.constant 0 : index
    %44 = vector.load %arg5[%c0_28, %c0_29, %c0_30] : memref<1x2x128xf32, #tpu.memory_space<vmem>>, vector<1x1x128xf32>
    %45 = vector.shape_cast %44 : vector<1x1x128xf32> to vector<1x128xf32>
    %46 = vector.shape_cast %43 : vector<1x128xf32> to vector<1x1x128xf32>
    tpu.vector_store %arg5[%c0_28, %c0_29, %c0_30], %46 {strides = array<i32>} : memref<1x2x128xf32, #tpu.memory_space<vmem>>, vector<1x1x128xf32>,
    %47 = arith.mulf %40, %40 : vector<384x128xf32>
    %cst_31 = arith.constant dense<0.000000e+00> : vector<1x128xf32>
    %48 = tpu.matmul %42, %47, %cst_31 {dimension_numbers = #tpu.dot_dimension_numbers<[1], [0], [0], [1], [0, 0, 1, 1], [], []>} : vector<1x384xf32>, vector<384x128xf32>, vector<1x128xf32> -> vector<1x128xf32>
    %c0_32 = arith.constant 0 : index
    %c1 = arith.constant 1 : index
    %c0_33 = arith.constant 0 : index
    %49 = vector.load %arg5[%c0_32, %c1, %c0_33] : memref<1x2x128xf32, #tpu.memory_space<vmem>>, vector<1x1x128xf32>
    %50 = vector.shape_cast %49 : vector<1x1x128xf32> to vector<1x128xf32>
    %51 = vector.shape_cast %48 : vector<1x128xf32> to vector<1x1x128xf32>
    tpu.vector_store %arg5[%c0_32, %c1, %c0_33], %51 {strides = array<i32>} : memref<1x2x128xf32, #tpu.memory_space<vmem>>, vector<1x1x128xf32>,
    return
  }
  func.func @transform_0(%arg0: i32) -> (i32, i32) {
    %c0_i32 = arith.constant 0 : i32
    %c0_i32_0 = arith.constant 0 : i32
    %c0_i32_1 = arith.constant 0 : i32
    return %c0_i32, %c0_i32_0 : i32, i32
  }
  func.func @transform_1(%arg0: i32) -> (i32, i32) {
    %c0_i32 = arith.constant 0 : i32
    %c0_i32_0 = arith.constant 0 : i32
    %c0_i32_1 = arith.constant 0 : i32
    return %c0_i32, %c0_i32_0 : i32, i32
  }
  func.func @transform_2(%arg0: i32) -> (i32, i32) {
    %c0_i32 = arith.constant 0 : i32
    %c0_i32_0 = arith.constant 0 : i32
    return %c0_i32, %arg0 : i32, i32
  }
  func.func @transform_3(%arg0: i32) -> (i32, i32) {
    %c0_i32 = arith.constant 0 : i32
    %c0_i32_0 = arith.constant 0 : i32
    return %arg0, %c0_i32 : i32, i32
  }
  func.func @transform_4(%arg0: i32) -> (i32, i32, i32) {
    %c0_i32 = arith.constant 0 : i32
    %c0_i32_0 = arith.constant 0 : i32
    %c0_i32_1 = arith.constant 0 : i32
    return %arg0, %c0_i32, %c0_i32_0 : i32, i32, i32
  }
}

</mosaic_0001>

<llo_original>
// kernel: tpu_custom_call.1
$region0: #{tpu_custom_call.1}
  #allocation0 [shape = 'u32[]', space=smem, size = 0x4, offset = 0x4, fixed_abs, tag = 'smem constant byte address 0x4 - core index']
  #allocation1 [shape = 'u32[72,128]{1,0:T(1,128)}', space=vmem, size = 0x9000, scoped, tag = 'internal scratch']
  %s0 = inlined_call_operand.vmem [shape: f32[808,4], index: 0, kind: input, shape index: {}]
  %s1 = inlined_call_operand.vmem [shape: f32[36,128], index: 1, kind: input, shape index: {}]
  %s2 = inlined_call_operand.vmem [shape: f32[1,768], index: 2, kind: input, shape index: {}]
  %s3 = inlined_call_operand.hbm [shape: f32[768,128], index: 3, kind: output, shape index: {0}]
  %s4 = inlined_call_operand.hbm [shape: f32[2,2,128], index: 4, kind: output, shape index: {1}]
  %5 = xla_tuple %s3, %s4
  %s6 = sld [smem:[#allocation0]]
  $region53: #{tpu_custom_call.1} parent=0
    _
  %s8 = ssub.s32 1, %s6
  %s9 = scalar_select 0, %s8, %s6
  $region1: #{tpu_custom_call.1} parent=0
    #allocation2 [shape = 'u8[393216]{0}', space=vmem, size = 0x60000, scoped, tag = 'output window, operand 0']
    #allocation3 [shape = 's32[2]{0}', space=sflag, size = 0x8, scoped, tag = 'scoped memory for tpu_custom_call.1']
    #allocation4 [shape = 'u8[2048]{0}', space=vmem, size = 0x800, scoped, tag = 'output window, operand 1']
    #allocation5 [shape = 's32[2]{0}', space=sflag, size = 0x8, scoped, tag = 'scoped memory for tpu_custom_call.1']
    %10 = vsyncpa [#allocation3], 0
    %s11 = scalar_lea.sflag [#allocation3], 1
    %12 = vsyncpa %s11, 0
    %13 = vsyncpa [#allocation5], 0
    %s14 = scalar_lea.sflag [#allocation5], 1
    %15 = vsyncpa %s14, 0
    loop: start=0, step=1, limit=4
    $region2: #{tpu_custom_call.1} parent=1 // loop_pre_header
      _
    $region3: #{tpu_custom_call.1} parent=1 // loop_header
      %s17 = sphi 0, %s21
      %p18 = scmp.ge.s32.totalorder %s17, 4
      %s25 = sphi 0, %s25
      %s27 = sphi 0, %s25
      %s28 = sphi 0, %s27
      %s42 = sphi 0, %s28
      %s46 = sphi 0, %s46
      %s48 = sphi 0, %s46
      %s49 = sphi 0, %s48
      %s63 = sphi 0, %s49
      %s69 = sphi 0, %s71
      %s72 = sphi 0, %s69
      %s73 = sphi 0, %s72
      %s89 = sphi 0, %s73
      %s95 = sphi 0, %s97
      %s98 = sphi 0, %s95
      %s99 = sphi 0, %s98
      %s115 = sphi 0, %s99
      %s121 = sphi 0, %s123
      %s124 = sphi 0, %s121
      %s125 = sphi 0, %s124
      %s141 = sphi 0, %s125
    $region4: #{tpu_custom_call.1} parent=1 // loop_header_branch
      %20 = sbr.rel (%p18) target = $region8
    $region5: #{tpu_custom_call.1} parent=1 // loop_body
      %s22 = ssub.s32 %s17, 1
      %s23 = ssub.s32 %s17, 2
      %s24 = sadd.s32 %s17, 1
      %s26 = sadd.s32 %s25, 1
      %p29 = scmp.eq.s32.totalorder %s17, 1
      %p30 = scmp.ne.s32.totalorder %s25, %s27
      %p31 = scmp.eq.s32.totalorder %s17, 0
      %p32 = por %p30, %p31
      %p33 = scmp.ne.s32.totalorder %s25, %s27
      %p34 = scmp.eq.s32.totalorder %s22, 1
      %p35 = por %p33, %p34
      %p36 = scmp.ne.s32.totalorder %s27, %s28
      %p37 = scmp.eq.s32.totalorder %s22, 0
      %p38 = por %p36, %p37
      %p39 = scmp.ne.s32.totalorder %s27, %s28
      %p40 = scmp.eq.s32.totalorder %s23, 1
      %p41 = por %p39, %p40
      %p43 = scmp.ne.s32.totalorder %s28, %s42
      %p44 = scmp.eq.s32.totalorder %s23, 0
      %p45 = por %p43, %p44
      %s47 = sadd.s32 %s46, 1
      %p50 = scmp.eq.s32.totalorder %s17, 1
      %p51 = scmp.ne.s32.totalorder %s46, %s48
      %p52 = scmp.eq.s32.totalorder %s17, 0
      %p53 = por %p51, %p52
      %p54 = scmp.ne.s32.totalorder %s46, %s48
      %p55 = scmp.eq.s32.totalorder %s22, 1
      %p56 = por %p54, %p55
      %p57 = scmp.ne.s32.totalorder %s48, %s49
      %p58 = scmp.eq.s32.totalorder %s22, 0
      %p59 = por %p57, %p58
      %p60 = scmp.ne.s32.totalorder %s48, %s49
      %p61 = scmp.eq.s32.totalorder %s23, 1
      %p62 = por %p60, %p61
      %p64 = scmp.ne.s32.totalorder %s49, %s63
      %p65 = scmp.eq.s32.totalorder %s23, 0
      %p66 = por %p64, %p65
      %s67 = ssub.s32 %s17, %s24
      %p68 = scmp.eq.s32.totalorder %s67, 0
      %s70 = sadd.s32 %s69, 1
      %s71 = scalar_select %p68, %s69, %s70
      %p74 = pneg %p68
      %p75 = scmp.eq.s32.totalorder %s17, 1
      %p76 = por %p74, %p75
      %p77 = scmp.ne.s32.totalorder %s69, %s72
      %p78 = scmp.eq.s32.totalorder %s17, 0
      %p79 = por %p77, %p78
      %p80 = scmp.ne.s32.totalorder %s69, %s72
      %p81 = scmp.eq.s32.totalorder %s22, 1
      %p82 = por %p80, %p81
      %p83 = scmp.ne.s32.totalorder %s72, %s73
      %p84 = scmp.eq.s32.totalorder %s22, 0
      %p85 = por %p83, %p84
      %p86 = scmp.ne.s32.totalorder %s72, %s73
      %p87 = scmp.eq.s32.totalorder %s23, 1
      %p88 = por %p86, %p87
      %p90 = scmp.ne.s32.totalorder %s73, %s89
      %p91 = scmp.eq.s32.totalorder %s23, 0
      %p92 = por %p90, %p91
      %s93 = ssub.s32 %s17, %s24
      %p94 = scmp.eq.s32.totalorder %s93, 0
      %s96 = sadd.s32 %s95, 1
      %s97 = scalar_select %p94, %s95, %s96
      %p100 = pneg %p94
      %p101 = scmp.eq.s32.totalorder %s17, 1
      %p102 = por %p100, %p101
      %p103 = scmp.ne.s32.totalorder %s95, %s98
      %p104 = scmp.eq.s32.totalorder %s17, 0
      %p105 = por %p103, %p104
      %p106 = scmp.ne.s32.totalorder %s95, %s98
      %p107 = scmp.eq.s32.totalorder %s22, 1
      %p108 = por %p106, %p107
      %p109 = scmp.ne.s32.totalorder %s98, %s99
      %p110 = scmp.eq.s32.totalorder %s22, 0
      %p111 = por %p109, %p110
      %p112 = scmp.ne.s32.totalorder %s98, %s99
      %p113 = scmp.eq.s32.totalorder %s23, 1
      %p114 = por %p112, %p113
      %p116 = scmp.ne.s32.totalorder %s99, %s115
      %p117 = scmp.eq.s32.totalorder %s23, 0
      %p118 = por %p116, %p117
      %s119 = ssub.s32 %s17, %s24
      %p120 = scmp.eq.s32.totalorder %s119, 0
      %s122 = sadd.s32 %s121, 1
      %s123 = scalar_select %p120, %s121, %s122
      %p126 = pneg %p120
      %p127 = scmp.eq.s32.totalorder %s17, 1
      %p128 = por %p126, %p127
      %p129 = scmp.ne.s32.totalorder %s121, %s124
      %p130 = scmp.eq.s32.totalorder %s17, 0
      %p131 = por %p129, %p130
      %p132 = scmp.ne.s32.totalorder %s121, %s124
      %p133 = scmp.eq.s32.totalorder %s22, 1
      %p134 = por %p132, %p133
      %p135 = scmp.ne.s32.totalorder %s124, %s125
      %p136 = scmp.eq.s32.totalorder %s22, 0
      %p137 = por %p135, %p136
      %p138 = scmp.ne.s32.totalorder %s124, %s125
      %p139 = scmp.eq.s32.totalorder %s23, 1
      %p140 = por %p138, %p139
      %p142 = scmp.ne.s32.totalorder %s125, %s141
      %p143 = scmp.eq.s32.totalorder %s23, 0
      %p144 = por %p142, %p143
      %p145 = scmp.le.s32.totalorder 1, %s17
      %p146 = scmp.lt.s32.totalorder %s17, 3
      %p147 = pnand %p145, %p146
      %p148 = pneg %p147
      // Predicated region
      $region9: #{tpu_custom_call.1} parent=5 // pred_check
        _
      $region10: #{tpu_custom_call.1} parent=5 // pred_check_branch
        %150 = sbr.rel (%p147) target = $region12
      $region11: #{tpu_custom_call.1} parent=5 // pred_region
        %s151 = ssub.s32 %s17, 1
        // Predicated region
        $region13: #{tpu_custom_call.1} parent=11 // pred_check
          %p152 = pneg %p38
        $region14: #{tpu_custom_call.1} parent=11 // pred_check_branch
          %154 = sbr.rel (%p152) target = $region16
        $region15: #{tpu_custom_call.1} parent=11 // pred_region
          _
        $region16: #{tpu_custom_call.1} parent=11 // pred_fallthru
          _
        // Predicated region
        $region17: #{tpu_custom_call.1} parent=11 // pred_check
          %p155 = pneg %p59
        $region18: #{tpu_custom_call.1} parent=11 // pred_check_branch
          %157 = sbr.rel (%p155) target = $region20
        $region19: #{tpu_custom_call.1} parent=11 // pred_region
          _
        $region20: #{tpu_custom_call.1} parent=11 // pred_fallthru
          _
      $region12: #{tpu_custom_call.1} parent=5 // pred_fallthru
        _
      %p158 = scmp.lt.s32.totalorder %s17, 2
      // Predicated region
      $region21: #{tpu_custom_call.1} parent=5 // pred_check
        %p159 = pneg %p158
      $region22: #{tpu_custom_call.1} parent=5 // pred_check_branch
        %161 = sbr.rel (%p159) target = $region24
      $region23: #{tpu_custom_call.1} parent=5 // pred_region
        // Predicated region
        $region25: #{tpu_custom_call.1} parent=23 // pred_check
          %p162 = pneg %p79
        $region26: #{tpu_custom_call.1} parent=23 // pred_check_branch
          %164 = sbr.rel (%p162) target = $region28
        $region27: #{tpu_custom_call.1} parent=23 // pred_region
          %s165 = smul.u32 3, %s17
          %p166 = scmp.lt.s32.totalorder %s165, 5
          %s167 = scalar_select %p166, %s165, 5
          %s168 = scalar_lea.vmem %s2, %s167
          %s169 = smul.u32 3, %s17
        $region28: #{tpu_custom_call.1} parent=23 // pred_fallthru
          _
      $region24: #{tpu_custom_call.1} parent=5 // pred_fallthru
        _
      %p170 = scmp.le.s32.totalorder 1, %s17
      %p171 = scmp.lt.s32.totalorder %s17, 3
      %p172 = pnand %p170, %p171
      %p173 = pneg %p172
      // Predicated region
      $region29: #{tpu_custom_call.1} parent=5 // pred_check
        _
      $region30: #{tpu_custom_call.1} parent=5 // pred_check_branch
        %175 = sbr.rel (%p172) target = $region32
      $region31: #{tpu_custom_call.1} parent=5 // pred_region
        %s176 = ssub.s32 %s17, 1
        %p177 = pneg %p38
        %p178 = pneg %p35
        %p179 = pneg %p59
        %p180 = pneg %p56
        %s181 = smul.u32 3, %s22
        %p182 = scmp.lt.s32.totalorder %s181, 5
        %s183 = scalar_select %p182, %s181, 5
        %s184 = scalar_lea.vmem %s2, %s183
        %p185 = pneg %p85
        %p186 = pneg %p82
        %p187 = pneg %p111
        %p188 = pneg %p108
        %s189 = sand.u32 %s98, 1
        %s190 = scalar_lea.sflag [#allocation3], %s189
        %s191 = sand.u32 %s98, 1
        %s192 = smul.addr %s191, 384
        %s193 = scalar_lea.vmem [#allocation2], %s192
        %p194 = pneg %p137
        %p195 = pneg %p134
        %s196 = sand.u32 %s124, 1
        %s197 = scalar_lea.sflag [#allocation5], %s196
        %s198 = sand.u32 %s124, 1
        %s199 = smul.addr %s198, 2
        %s200 = scalar_lea.vmem [#allocation4], %s199
        %s201 = smul.u32 3, %s22
        %p202 = scmp.lt.s32.totalorder %s201, 5
        %s203 = scalar_select %p202, %s201, 5
        %s204 = scalar_lea.vmem %s2, %s203
        %s205 = smul.u32 3, %s22
        %s206 = smul.u32 48, %s22
        %s207 = smul.u32 %s22, 384
        %s208 = scalar_lea.vmem %s0, %s207
        %v209 = vld [vmem:[%s208] sm:$0xff]
        %v210 = vld [vmem:[%s208 + $0x8] sm:$0xff]
        %v211 = vld [vmem:[%s208 + $0x10] sm:$0xff]
        %v212 = vld [vmem:[%s208 + $0x18] sm:$0xff]
        %v213 = vld [vmem:[%s208 + $0x20] sm:$0xff]
        %v214 = vld [vmem:[%s208 + $0x28] sm:$0xff]
        %v215 = vld [vmem:[%s208 + $0x30] sm:$0xff]
        %v216 = vld [vmem:[%s208 + $0x38] sm:$0xff]
        %v217 = vld [vmem:[%s208 + $0x40] sm:$0xff]
        %v218 = vld [vmem:[%s208 + $0x48] sm:$0xff]
        %v219 = vld [vmem:[%s208 + $0x50] sm:$0xff]
        %v220 = vld [vmem:[%s208 + $0x58] sm:$0xff]
        %v221 = vld [vmem:[%s208 + $0x60] sm:$0xff]
        %v222 = vld [vmem:[%s208 + $0x68] sm:$0xff]
        %v223 = vld [vmem:[%s208 + $0x70] sm:$0xff]
        %v224 = vld [vmem:[%s208 + $0x78] sm:$0xff]
        %v225 = vld [vmem:[%s208 + $0x80] sm:$0xff]
        %v226 = vld [vmem:[%s208 + $0x88] sm:$0xff]
        %v227 = vld [vmem:[%s208 + $0x90] sm:$0xff]
        %v228 = vld [vmem:[%s208 + $0x98] sm:$0xff]
        %v229 = vld [vmem:[%s208 + $0xa0] sm:$0xff]
        %v230 = vld [vmem:[%s208 + $0xa8] sm:$0xff]
        %v231 = vld [vmem:[%s208 + $0xb0] sm:$0xff]
        %v232 = vld [vmem:[%s208 + $0xb8] sm:$0xff]
        %v233 = vld [vmem:[%s208 + $0xc0] sm:$0xff]
        %v234 = vld [vmem:[%s208 + $0xc8] sm:$0xff]
        %v235 = vld [vmem:[%s208 + $0xd0] sm:$0xff]
        %v236 = vld [vmem:[%s208 + $0xd8] sm:$0xff]
        %v237 = vld [vmem:[%s208 + $0xe0] sm:$0xff]
        %v238 = vld [vmem:[%s208 + $0xe8] sm:$0xff]
        %v239 = vld [vmem:[%s208 + $0xf0] sm:$0xff]
        %v240 = vld [vmem:[%s208 + $0xf8] sm:$0xff]
        %v241 = vld [vmem:[%s208 + $0x100] sm:$0xff]
        %v242 = vld [vmem:[%s208 + $0x108] sm:$0xff]
        %v243 = vld [vmem:[%s208 + $0x110] sm:$0xff]
        %v244 = vld [vmem:[%s208 + $0x118] sm:$0xff]
        %v245 = vld [vmem:[%s208 + $0x120] sm:$0xff]
        %v246 = vld [vmem:[%s208 + $0x128] sm:$0xff]
        %v247 = vld [vmem:[%s208 + $0x130] sm:$0xff]
        %v248 = vld [vmem:[%s208 + $0x138] sm:$0xff]
        %v249 = vld [vmem:[%s208 + $0x140] sm:$0xff]
        %v250 = vld [vmem:[%s208 + $0x148] sm:$0xff]
        %v251 = vld [vmem:[%s208 + $0x150] sm:$0xff]
        %v252 = vld [vmem:[%s208 + $0x158] sm:$0xff]
        %v253 = vld [vmem:[%s208 + $0x160] sm:$0xff]
        %v254 = vld [vmem:[%s208 + $0x168] sm:$0xff]
        %v255 = vld [vmem:[%s208 + $0x170] sm:$0xff]
        %v256 = vld [vmem:[%s208 + $0x178] sm:$0xff]
        %s257 = sadd.s32 %s207, 1
        %s258 = scalar_lea.vmem %s0, %s257
        %v259 = vld [vmem:[%s258] sm:$0xff]
        %v260 = vld [vmem:[%s258 + $0x8] sm:$0xff]
        %v261 = vld [vmem:[%s258 + $0x10] sm:$0xff]
        %v262 = vld [vmem:[%s258 + $0x18] sm:$0xff]
        %v263 = vld [vmem:[%s258 + $0x20] sm:$0xff]
        %v264 = vld [vmem:[%s258 + $0x28] sm:$0xff]
        %v265 = vld [vmem:[%s258 + $0x30] sm:$0xff]
        %v266 = vld [vmem:[%s258 + $0x38] sm:$0xff]
        %v267 = vld [vmem:[%s258 + $0x40] sm:$0xff]
        %v268 = vld [vmem:[%s258 + $0x48] sm:$0xff]
        %v269 = vld [vmem:[%s258 + $0x50] sm:$0xff]
        %v270 = vld [vmem:[%s258 + $0x58] sm:$0xff]
        %v271 = vld [vmem:[%s258 + $0x60] sm:$0xff]
        %v272 = vld [vmem:[%s258 + $0x68] sm:$0xff]
        %v273 = vld [vmem:[%s258 + $0x70] sm:$0xff]
        %v274 = vld [vmem:[%s258 + $0x78] sm:$0xff]
        %v275 = vld [vmem:[%s258 + $0x80] sm:$0xff]
        %v276 = vld [vmem:[%s258 + $0x88] sm:$0xff]
        %v277 = vld [vmem:[%s258 + $0x90] sm:$0xff]
        %v278 = vld [vmem:[%s258 + $0x98] sm:$0xff]
        %v279 = vld [vmem:[%s258 + $0xa0] sm:$0xff]
        %v280 = vld [vmem:[%s258 + $0xa8] sm:$0xff]
        %v281 = vld [vmem:[%s258 + $0xb0] sm:$0xff]
        %v282 = vld [vmem:[%s258 + $0xb8] sm:$0xff]
        %v283 = vld [vmem:[%s258 + $0xc0] sm:$0xff]
        %v284 = vld [vmem:[%s258 + $0xc8] sm:$0xff]
        %v285 = vld [vmem:[%s258 + $0xd0] sm:$0xff]
        %v286 = vld [vmem:[%s258 + $0xd8] sm:$0xff]
        %v287 = vld [vmem:[%s258 + $0xe0] sm:$0xff]
        %v288 = vld [vmem:[%s258 + $0xe8] sm:$0xff]
        %v289 = vld [vmem:[%s258 + $0xf0] sm:$0xff]
        %v290 = vld [vmem:[%s258 + $0xf8] sm:$0xff]
        %v291 = vld [vmem:[%s258 + $0x100] sm:$0xff]
        %v292 = vld [vmem:[%s258 + $0x108] sm:$0xff]
        %v293 = vld [vmem:[%s258 + $0x110] sm:$0xff]
        %v294 = vld [vmem:[%s258 + $0x118] sm:$0xff]
        %v295 = vld [vmem:[%s258 + $0x120] sm:$0xff]
        %v296 = vld [vmem:[%s258 + $0x128] sm:$0xff]
        %v297 = vld [vmem:[%s258 + $0x130] sm:$0xff]
        %v298 = vld [vmem:[%s258 + $0x138] sm:$0xff]
        %v299 = vld [vmem:[%s258 + $0x140] sm:$0xff]
        %v300 = vld [vmem:[%s258 + $0x148] sm:$0xff]
        %v301 = vld [vmem:[%s258 + $0x150] sm:$0xff]
        %v302 = vld [vmem:[%s258 + $0x158] sm:$0xff]
        %v303 = vld [vmem:[%s258 + $0x160] sm:$0xff]
        %v304 = vld [vmem:[%s258 + $0x168] sm:$0xff]
        %v305 = vld [vmem:[%s258 + $0x170] sm:$0xff]
        %v306 = vld [vmem:[%s258 + $0x178] sm:$0xff]
        %s307 = sadd.s32 %s207, 2
        %s308 = scalar_lea.vmem %s0, %s307
        %v309 = vld [vmem:[%s308] sm:$0xff]
        %v310 = vld [vmem:[%s308 + $0x8] sm:$0xff]
        %v311 = vld [vmem:[%s308 + $0x10] sm:$0xff]
        %v312 = vld [vmem:[%s308 + $0x18] sm:$0xff]
        %v313 = vld [vmem:[%s308 + $0x20] sm:$0xff]
        %v314 = vld [vmem:[%s308 + $0x28] sm:$0xff]
        %v315 = vld [vmem:[%s308 + $0x30] sm:$0xff]
        %v316 = vld [vmem:[%s308 + $0x38] sm:$0xff]
        %v317 = vld [vmem:[%s308 + $0x40] sm:$0xff]
        %v318 = vld [vmem:[%s308 + $0x48] sm:$0xff]
        %v319 = vld [vmem:[%s308 + $0x50] sm:$0xff]
        %v320 = vld [vmem:[%s308 + $0x58] sm:$0xff]
        %v321 = vld [vmem:[%s308 + $0x60] sm:$0xff]
        %v322 = vld [vmem:[%s308 + $0x68] sm:$0xff]
        %v323 = vld [vmem:[%s308 + $0x70] sm:$0xff]
        %v324 = vld [vmem:[%s308 + $0x78] sm:$0xff]
        %v325 = vld [vmem:[%s308 + $0x80] sm:$0xff]
        %v326 = vld [vmem:[%s308 + $0x88] sm:$0xff]
        %v327 = vld [vmem:[%s308 + $0x90] sm:$0xff]
        %v328 = vld [vmem:[%s308 + $0x98] sm:$0xff]
        %v329 = vld [vmem:[%s308 + $0xa0] sm:$0xff]
        %v330 = vld [vmem:[%s308 + $0xa8] sm:$0xff]
        %v331 = vld [vmem:[%s308 + $0xb0] sm:$0xff]
        %v332 = vld [vmem:[%s308 + $0xb8] sm:$0xff]
        %v333 = vld [vmem:[%s308 + $0xc0] sm:$0xff]
        %v334 = vld [vmem:[%s308 + $0xc8] sm:$0xff]
        %v335 = vld [vmem:[%s308 + $0xd0] sm:$0xff]
        %v336 = vld [vmem:[%s308 + $0xd8] sm:$0xff]
        %v337 = vld [vmem:[%s308 + $0xe0] sm:$0xff]
        %v338 = vld [vmem:[%s308 + $0xe8] sm:$0xff]
        %v339 = vld [vmem:[%s308 + $0xf0] sm:$0xff]
        %v340 = vld [vmem:[%s308 + $0xf8] sm:$0xff]
        %v341 = vld [vmem:[%s308 + $0x100] sm:$0xff]
        %v342 = vld [vmem:[%s308 + $0x108] sm:$0xff]
        %v343 = vld [vmem:[%s308 + $0x110] sm:$0xff]
        %v344 = vld [vmem:[%s308 + $0x118] sm:$0xff]
        %v345 = vld [vmem:[%s308 + $0x120] sm:$0xff]
        %v346 = vld [vmem:[%s308 + $0x128] sm:$0xff]
        %v347 = vld [vmem:[%s308 + $0x130] sm:$0xff]
        %v348 = vld [vmem:[%s308 + $0x138] sm:$0xff]
        %v349 = vld [vmem:[%s308 + $0x140] sm:$0xff]
        %v350 = vld [vmem:[%s308 + $0x148] sm:$0xff]
        %v351 = vld [vmem:[%s308 + $0x150] sm:$0xff]
        %v352 = vld [vmem:[%s308 + $0x158] sm:$0xff]
        %v353 = vld [vmem:[%s308 + $0x160] sm:$0xff]
        %v354 = vld [vmem:[%s308 + $0x168] sm:$0xff]
        %v355 = vld [vmem:[%s308 + $0x170] sm:$0xff]
        %v356 = vld [vmem:[%s308 + $0x178] sm:$0xff]
        %s357 = sadd.s32 %s207, 18
        %s358 = scalar_lea.vmem %s0, %s357
        %v359 = vld [vmem:[%s358] sm:$0xff]
        %v360 = vld [vmem:[%s358 + $0x8] sm:$0xff]
        %v361 = vld [vmem:[%s358 + $0x10] sm:$0xff]
        %v362 = vld [vmem:[%s358 + $0x18] sm:$0xff]
        %v363 = vld [vmem:[%s358 + $0x20] sm:$0xff]
        %v364 = vld [vmem:[%s358 + $0x28] sm:$0xff]
        %v365 = vld [vmem:[%s358 + $0x30] sm:$0xff]
        %v366 = vld [vmem:[%s358 + $0x38] sm:$0xff]
        %v367 = vld [vmem:[%s358 + $0x40] sm:$0xff]
        %v368 = vld [vmem:[%s358 + $0x48] sm:$0xff]
        %v369 = vld [vmem:[%s358 + $0x50] sm:$0xff]
        %v370 = vld [vmem:[%s358 + $0x58] sm:$0xff]
        %v371 = vld [vmem:[%s358 + $0x60] sm:$0xff]
        %v372 = vld [vmem:[%s358 + $0x68] sm:$0xff]
        %v373 = vld [vmem:[%s358 + $0x70] sm:$0xff]
        %v374 = vld [vmem:[%s358 + $0x78] sm:$0xff]
        %v375 = vld [vmem:[%s358 + $0x80] sm:$0xff]
        %v376 = vld [vmem:[%s358 + $0x88] sm:$0xff]
        %v377 = vld [vmem:[%s358 + $0x90] sm:$0xff]
        %v378 = vld [vmem:[%s358 + $0x98] sm:$0xff]
        %v379 = vld [vmem:[%s358 + $0xa0] sm:$0xff]
        %v380 = vld [vmem:[%s358 + $0xa8] sm:$0xff]
        %v381 = vld [vmem:[%s358 + $0xb0] sm:$0xff]
        %v382 = vld [vmem:[%s358 + $0xb8] sm:$0xff]
        %v383 = vld [vmem:[%s358 + $0xc0] sm:$0xff]
        %v384 = vld [vmem:[%s358 + $0xc8] sm:$0xff]
        %v385 = vld [vmem:[%s358 + $0xd0] sm:$0xff]
        %v386 = vld [vmem:[%s358 + $0xd8] sm:$0xff]
        %v387 = vld [vmem:[%s358 + $0xe0] sm:$0xff]
        %v388 = vld [vmem:[%s358 + $0xe8] sm:$0xff]
        %v389 = vld [vmem:[%s358 + $0xf0] sm:$0xff]
        %v390 = vld [vmem:[%s358 + $0xf8] sm:$0xff]
        %v391 = vld [vmem:[%s358 + $0x100] sm:$0xff]
        %v392 = vld [vmem:[%s358 + $0x108] sm:$0xff]
        %v393 = vld [vmem:[%s358 + $0x110] sm:$0xff]
        %v394 = vld [vmem:[%s358 + $0x118] sm:$0xff]
        %v395 = vld [vmem:[%s358 + $0x120] sm:$0xff]
        %v396 = vld [vmem:[%s358 + $0x128] sm:$0xff]
        %v397 = vld [vmem:[%s358 + $0x130] sm:$0xff]
        %v398 = vld [vmem:[%s358 + $0x138] sm:$0xff]
        %v399 = vld [vmem:[%s358 + $0x140] sm:$0xff]
        %v400 = vld [vmem:[%s358 + $0x148] sm:$0xff]
        %v401 = vld [vmem:[%s358 + $0x150] sm:$0xff]
        %v402 = vld [vmem:[%s358 + $0x158] sm:$0xff]
        %v403 = vld [vmem:[%s358 + $0x160] sm:$0xff]
        %v404 = vld [vmem:[%s358 + $0x168] sm:$0xff]
        %v405 = vld [vmem:[%s358 + $0x170] sm:$0xff]
        %v406 = vld [vmem:[%s358 + $0x178] sm:$0xff]
        %s407 = sadd.s32 %s207, 19
        %s408 = scalar_lea.vmem %s0, %s407
        %v409 = vld [vmem:[%s408] sm:$0xff]
        %v410 = vld [vmem:[%s408 + $0x8] sm:$0xff]
        %v411 = vld [vmem:[%s408 + $0x10] sm:$0xff]
        %v412 = vld [vmem:[%s408 + $0x18] sm:$0xff]
        %v413 = vld [vmem:[%s408 + $0x20] sm:$0xff]
        %v414 = vld [vmem:[%s408 + $0x28] sm:$0xff]
        %v415 = vld [vmem:[%s408 + $0x30] sm:$0xff]
        %v416 = vld [vmem:[%s408 + $0x38] sm:$0xff]
        %v417 = vld [vmem:[%s408 + $0x40] sm:$0xff]
        %v418 = vld [vmem:[%s408 + $0x48] sm:$0xff]
        %v419 = vld [vmem:[%s408 + $0x50] sm:$0xff]
        %v420 = vld [vmem:[%s408 + $0x58] sm:$0xff]
        %v421 = vld [vmem:[%s408 + $0x60] sm:$0xff]
        %v422 = vld [vmem:[%s408 + $0x68] sm:$0xff]
        %v423 = vld [vmem:[%s408 + $0x70] sm:$0xff]
        %v424 = vld [vmem:[%s408 + $0x78] sm:$0xff]
        %v425 = vld [vmem:[%s408 + $0x80] sm:$0xff]
        %v426 = vld [vmem:[%s408 + $0x88] sm:$0xff]
        %v427 = vld [vmem:[%s408 + $0x90] sm:$0xff]
        %v428 = vld [vmem:[%s408 + $0x98] sm:$0xff]
        %v429 = vld [vmem:[%s408 + $0xa0] sm:$0xff]
        %v430 = vld [vmem:[%s408 + $0xa8] sm:$0xff]
        %v431 = vld [vmem:[%s408 + $0xb0] sm:$0xff]
        %v432 = vld [vmem:[%s408 + $0xb8] sm:$0xff]
        %v433 = vld [vmem:[%s408 + $0xc0] sm:$0xff]
        %v434 = vld [vmem:[%s408 + $0xc8] sm:$0xff]
        %v435 = vld [vmem:[%s408 + $0xd0] sm:$0xff]
        %v436 = vld [vmem:[%s408 + $0xd8] sm:$0xff]
        %v437 = vld [vmem:[%s408 + $0xe0] sm:$0xff]
        %v438 = vld [vmem:[%s408 + $0xe8] sm:$0xff]
        %v439 = vld [vmem:[%s408 + $0xf0] sm:$0xff]
        %v440 = vld [vmem:[%s408 + $0xf8] sm:$0xff]
        %v441 = vld [vmem:[%s408 + $0x100] sm:$0xff]
        %v442 = vld [vmem:[%s408 + $0x108] sm:$0xff]
        %v443 = vld [vmem:[%s408 + $0x110] sm:$0xff]
        %v444 = vld [vmem:[%s408 + $0x118] sm:$0xff]
        %v445 = vld [vmem:[%s408 + $0x120] sm:$0xff]
        %v446 = vld [vmem:[%s408 + $0x128] sm:$0xff]
        %v447 = vld [vmem:[%s408 + $0x130] sm:$0xff]
        %v448 = vld [vmem:[%s408 + $0x138] sm:$0xff]
        %v449 = vld [vmem:[%s408 + $0x140] sm:$0xff]
        %v450 = vld [vmem:[%s408 + $0x148] sm:$0xff]
        %v451 = vld [vmem:[%s408 + $0x150] sm:$0xff]
        %v452 = vld [vmem:[%s408 + $0x158] sm:$0xff]
        %v453 = vld [vmem:[%s408 + $0x160] sm:$0xff]
        %v454 = vld [vmem:[%s408 + $0x168] sm:$0xff]
        %v455 = vld [vmem:[%s408 + $0x170] sm:$0xff]
        %v456 = vld [vmem:[%s408 + $0x178] sm:$0xff]
        %s457 = sadd.s32 %s207, 20
        %s458 = scalar_lea.vmem %s0, %s457
        %v459 = vld [vmem:[%s458] sm:$0xff]
        %v460 = vld [vmem:[%s458 + $0x8] sm:$0xff]
        %v461 = vld [vmem:[%s458 + $0x10] sm:$0xff]
        %v462 = vld [vmem:[%s458 + $0x18] sm:$0xff]
        %v463 = vld [vmem:[%s458 + $0x20] sm:$0xff]
        %v464 = vld [vmem:[%s458 + $0x28] sm:$0xff]
        %v465 = vld [vmem:[%s458 + $0x30] sm:$0xff]
        %v466 = vld [vmem:[%s458 + $0x38] sm:$0xff]
        %v467 = vld [vmem:[%s458 + $0x40] sm:$0xff]
        %v468 = vld [vmem:[%s458 + $0x48] sm:$0xff]
        %v469 = vld [vmem:[%s458 + $0x50] sm:$0xff]
        %v470 = vld [vmem:[%s458 + $0x58] sm:$0xff]
        %v471 = vld [vmem:[%s458 + $0x60] sm:$0xff]
        %v472 = vld [vmem:[%s458 + $0x68] sm:$0xff]
        %v473 = vld [vmem:[%s458 + $0x70] sm:$0xff]
        %v474 = vld [vmem:[%s458 + $0x78] sm:$0xff]
        %v475 = vld [vmem:[%s458 + $0x80] sm:$0xff]
        %v476 = vld [vmem:[%s458 + $0x88] sm:$0xff]
        %v477 = vld [vmem:[%s458 + $0x90] sm:$0xff]
        %v478 = vld [vmem:[%s458 + $0x98] sm:$0xff]
        %v479 = vld [vmem:[%s458 + $0xa0] sm:$0xff]
        %v480 = vld [vmem:[%s458 + $0xa8] sm:$0xff]
        %v481 = vld [vmem:[%s458 + $0xb0] sm:$0xff]
        %v482 = vld [vmem:[%s458 + $0xb8] sm:$0xff]
        %v483 = vld [vmem:[%s458 + $0xc0] sm:$0xff]
        %v484 = vld [vmem:[%s458 + $0xc8] sm:$0xff]
        %v485 = vld [vmem:[%s458 + $0xd0] sm:$0xff]
        %v486 = vld [vmem:[%s458 + $0xd8] sm:$0xff]
        %v487 = vld [vmem:[%s458 + $0xe0] sm:$0xff]
        %v488 = vld [vmem:[%s458 + $0xe8] sm:$0xff]
        %v489 = vld [vmem:[%s458 + $0xf0] sm:$0xff]
        %v490 = vld [vmem:[%s458 + $0xf8] sm:$0xff]
        %v491 = vld [vmem:[%s458 + $0x100] sm:$0xff]
        %v492 = vld [vmem:[%s458 + $0x108] sm:$0xff]
        %v493 = vld [vmem:[%s458 + $0x110] sm:$0xff]
        %v494 = vld [vmem:[%s458 + $0x118] sm:$0xff]
        %v495 = vld [vmem:[%s458 + $0x120] sm:$0xff]
        %v496 = vld [vmem:[%s458 + $0x128] sm:$0xff]
        %v497 = vld [vmem:[%s458 + $0x130] sm:$0xff]
        %v498 = vld [vmem:[%s458 + $0x138] sm:$0xff]
        %v499 = vld [vmem:[%s458 + $0x140] sm:$0xff]
        %v500 = vld [vmem:[%s458 + $0x148] sm:$0xff]
        %v501 = vld [vmem:[%s458 + $0x150] sm:$0xff]
        %v502 = vld [vmem:[%s458 + $0x158] sm:$0xff]
        %v503 = vld [vmem:[%s458 + $0x160] sm:$0xff]
        %v504 = vld [vmem:[%s458 + $0x168] sm:$0xff]
        %v505 = vld [vmem:[%s458 + $0x170] sm:$0xff]
        %v506 = vld [vmem:[%s458 + $0x178] sm:$0xff]
        %s507 = sadd.s32 %s207, 36
        %s508 = scalar_lea.vmem %s0, %s507
        %v509 = vld [vmem:[%s508] sm:$0xff]
        %v510 = vld [vmem:[%s508 + $0x8] sm:$0xff]
        %v511 = vld [vmem:[%s508 + $0x10] sm:$0xff]
        %v512 = vld [vmem:[%s508 + $0x18] sm:$0xff]
        %v513 = vld [vmem:[%s508 + $0x20] sm:$0xff]
        %v514 = vld [vmem:[%s508 + $0x28] sm:$0xff]
        %v515 = vld [vmem:[%s508 + $0x30] sm:$0xff]
        %v516 = vld [vmem:[%s508 + $0x38] sm:$0xff]
        %v517 = vld [vmem:[%s508 + $0x40] sm:$0xff]
        %v518 = vld [vmem:[%s508 + $0x48] sm:$0xff]
        %v519 = vld [vmem:[%s508 + $0x50] sm:$0xff]
        %v520 = vld [vmem:[%s508 + $0x58] sm:$0xff]
        %v521 = vld [vmem:[%s508 + $0x60] sm:$0xff]
        %v522 = vld [vmem:[%s508 + $0x68] sm:$0xff]
        %v523 = vld [vmem:[%s508 + $0x70] sm:$0xff]
        %v524 = vld [vmem:[%s508 + $0x78] sm:$0xff]
        %v525 = vld [vmem:[%s508 + $0x80] sm:$0xff]
        %v526 = vld [vmem:[%s508 + $0x88] sm:$0xff]
        %v527 = vld [vmem:[%s508 + $0x90] sm:$0xff]
        %v528 = vld [vmem:[%s508 + $0x98] sm:$0xff]
        %v529 = vld [vmem:[%s508 + $0xa0] sm:$0xff]
        %v530 = vld [vmem:[%s508 + $0xa8] sm:$0xff]
        %v531 = vld [vmem:[%s508 + $0xb0] sm:$0xff]
        %v532 = vld [vmem:[%s508 + $0xb8] sm:$0xff]
        %v533 = vld [vmem:[%s508 + $0xc0] sm:$0xff]
        %v534 = vld [vmem:[%s508 + $0xc8] sm:$0xff]
        %v535 = vld [vmem:[%s508 + $0xd0] sm:$0xff]
        %v536 = vld [vmem:[%s508 + $0xd8] sm:$0xff]
        %v537 = vld [vmem:[%s508 + $0xe0] sm:$0xff]
        %v538 = vld [vmem:[%s508 + $0xe8] sm:$0xff]
        %v539 = vld [vmem:[%s508 + $0xf0] sm:$0xff]
        %v540 = vld [vmem:[%s508 + $0xf8] sm:$0xff]
        %v541 = vld [vmem:[%s508 + $0x100] sm:$0xff]
        %v542 = vld [vmem:[%s508 + $0x108] sm:$0xff]
        %v543 = vld [vmem:[%s508 + $0x110] sm:$0xff]
        %v544 = vld [vmem:[%s508 + $0x118] sm:$0xff]
        %v545 = vld [vmem:[%s508 + $0x120] sm:$0xff]
        %v546 = vld [vmem:[%s508 + $0x128] sm:$0xff]
        %v547 = vld [vmem:[%s508 + $0x130] sm:$0xff]
        %v548 = vld [vmem:[%s508 + $0x138] sm:$0xff]
        %v549 = vld [vmem:[%s508 + $0x140] sm:$0xff]
        %v550 = vld [vmem:[%s508 + $0x148] sm:$0xff]
        %v551 = vld [vmem:[%s508 + $0x150] sm:$0xff]
        %v552 = vld [vmem:[%s508 + $0x158] sm:$0xff]
        %v553 = vld [vmem:[%s508 + $0x160] sm:$0xff]
        %v554 = vld [vmem:[%s508 + $0x168] sm:$0xff]
        %v555 = vld [vmem:[%s508 + $0x170] sm:$0xff]
        %v556 = vld [vmem:[%s508 + $0x178] sm:$0xff]
        %s557 = sadd.s32 %s207, 37
        %s558 = scalar_lea.vmem %s0, %s557
        %v559 = vld [vmem:[%s558] sm:$0xff]
        %v560 = vld [vmem:[%s558 + $0x8] sm:$0xff]
        %v561 = vld [vmem:[%s558 + $0x10] sm:$0xff]
        %v562 = vld [vmem:[%s558 + $0x18] sm:$0xff]
        %v563 = vld [vmem:[%s558 + $0x20] sm:$0xff]
        %v564 = vld [vmem:[%s558 + $0x28] sm:$0xff]
        %v565 = vld [vmem:[%s558 + $0x30] sm:$0xff]
        %v566 = vld [vmem:[%s558 + $0x38] sm:$0xff]
        %v567 = vld [vmem:[%s558 + $0x40] sm:$0xff]
        %v568 = vld [vmem:[%s558 + $0x48] sm:$0xff]
        %v569 = vld [vmem:[%s558 + $0x50] sm:$0xff]
        %v570 = vld [vmem:[%s558 + $0x58] sm:$0xff]
        %v571 = vld [vmem:[%s558 + $0x60] sm:$0xff]
        %v572 = vld [vmem:[%s558 + $0x68] sm:$0xff]
        %v573 = vld [vmem:[%s558 + $0x70] sm:$0xff]
        %v574 = vld [vmem:[%s558 + $0x78] sm:$0xff]
        %v575 = vld [vmem:[%s558 + $0x80] sm:$0xff]
        %v576 = vld [vmem:[%s558 + $0x88] sm:$0xff]
        %v577 = vld [vmem:[%s558 + $0x90] sm:$0xff]
        %v578 = vld [vmem:[%s558 + $0x98] sm:$0xff]
        %v579 = vld [vmem:[%s558 + $0xa0] sm:$0xff]
        %v580 = vld [vmem:[%s558 + $0xa8] sm:$0xff]
        %v581 = vld [vmem:[%s558 + $0xb0] sm:$0xff]
        %v582 = vld [vmem:[%s558 + $0xb8] sm:$0xff]
        %v583 = vld [vmem:[%s558 + $0xc0] sm:$0xff]
        %v584 = vld [vmem:[%s558 + $0xc8] sm:$0xff]
        %v585 = vld [vmem:[%s558 + $0xd0] sm:$0xff]
        %v586 = vld [vmem:[%s558 + $0xd8] sm:$0xff]
        %v587 = vld [vmem:[%s558 + $0xe0] sm:$0xff]
        %v588 = vld [vmem:[%s558 + $0xe8] sm:$0xff]
        %v589 = vld [vmem:[%s558 + $0xf0] sm:$0xff]
        %v590 = vld [vmem:[%s558 + $0xf8] sm:$0xff]
        %v591 = vld [vmem:[%s558 + $0x100] sm:$0xff]
        %v592 = vld [vmem:[%s558 + $0x108] sm:$0xff]
        %v593 = vld [vmem:[%s558 + $0x110] sm:$0xff]
        %v594 = vld [vmem:[%s558 + $0x118] sm:$0xff]
        %v595 = vld [vmem:[%s558 + $0x120] sm:$0xff]
        %v596 = vld [vmem:[%s558 + $0x128] sm:$0xff]
        %v597 = vld [vmem:[%s558 + $0x130] sm:$0xff]
        %v598 = vld [vmem:[%s558 + $0x138] sm:$0xff]
        %v599 = vld [vmem:[%s558 + $0x140] sm:$0xff]
        %v600 = vld [vmem:[%s558 + $0x148] sm:$0xff]
        %v601 = vld [vmem:[%s558 + $0x150] sm:$0xff]
        %v602 = vld [vmem:[%s558 + $0x158] sm:$0xff]
        %v603 = vld [vmem:[%s558 + $0x160] sm:$0xff]
        %v604 = vld [vmem:[%s558 + $0x168] sm:$0xff]
        %v605 = vld [vmem:[%s558 + $0x170] sm:$0xff]
        %v606 = vld [vmem:[%s558 + $0x178] sm:$0xff]
        %s607 = sadd.s32 %s207, 38
        %s608 = scalar_lea.vmem %s0, %s607
        %v609 = vld [vmem:[%s608] sm:$0xff]
        %v610 = vld [vmem:[%s608 + $0x8] sm:$0xff]
        %v611 = vld [vmem:[%s608 + $0x10] sm:$0xff]
        %v612 = vld [vmem:[%s608 + $0x18] sm:$0xff]
        %v613 = vld [vmem:[%s608 + $0x20] sm:$0xff]
        %v614 = vld [vmem:[%s608 + $0x28] sm:$0xff]
        %v615 = vld [vmem:[%s608 + $0x30] sm:$0xff]
        %v616 = vld [vmem:[%s608 + $0x38] sm:$0xff]
        %v617 = vld [vmem:[%s608 + $0x40] sm:$0xff]
        %v618 = vld [vmem:[%s608 + $0x48] sm:$0xff]
        %v619 = vld [vmem:[%s608 + $0x50] sm:$0xff]
        %v620 = vld [vmem:[%s608 + $0x58] sm:$0xff]
        %v621 = vld [vmem:[%s608 + $0x60] sm:$0xff]
        %v622 = vld [vmem:[%s608 + $0x68] sm:$0xff]
        %v623 = vld [vmem:[%s608 + $0x70] sm:$0xff]
        %v624 = vld [vmem:[%s608 + $0x78] sm:$0xff]
        %v625 = vld [vmem:[%s608 + $0x80] sm:$0xff]
        %v626 = vld [vmem:[%s608 + $0x88] sm:$0xff]
        %v627 = vld [vmem:[%s608 + $0x90] sm:$0xff]
        %v628 = vld [vmem:[%s608 + $0x98] sm:$0xff]
        %v629 = vld [vmem:[%s608 + $0xa0] sm:$0xff]
        %v630 = vld [vmem:[%s608 + $0xa8] sm:$0xff]
        %v631 = vld [vmem:[%s608 + $0xb0] sm:$0xff]
        %v632 = vld [vmem:[%s608 + $0xb8] sm:$0xff]
        %v633 = vld [vmem:[%s608 + $0xc0] sm:$0xff]
        %v634 = vld [vmem:[%s608 + $0xc8] sm:$0xff]
        %v635 = vld [vmem:[%s608 + $0xd0] sm:$0xff]
        %v636 = vld [vmem:[%s608 + $0xd8] sm:$0xff]
        %v637 = vld [vmem:[%s608 + $0xe0] sm:$0xff]
        %v638 = vld [vmem:[%s608 + $0xe8] sm:$0xff]
        %v639 = vld [vmem:[%s608 + $0xf0] sm:$0xff]
        %v640 = vld [vmem:[%s608 + $0xf8] sm:$0xff]
        %v641 = vld [vmem:[%s608 + $0x100] sm:$0xff]
        %v642 = vld [vmem:[%s608 + $0x108] sm:$0xff]
        %v643 = vld [vmem:[%s608 + $0x110] sm:$0xff]
        %v644 = vld [vmem:[%s608 + $0x118] sm:$0xff]
        %v645 = vld [vmem:[%s608 + $0x120] sm:$0xff]
        %v646 = vld [vmem:[%s608 + $0x128] sm:$0xff]
        %v647 = vld [vmem:[%s608 + $0x130] sm:$0xff]
        %v648 = vld [vmem:[%s608 + $0x138] sm:$0xff]
        %v649 = vld [vmem:[%s608 + $0x140] sm:$0xff]
        %v650 = vld [vmem:[%s608 + $0x148] sm:$0xff]
        %v651 = vld [vmem:[%s608 + $0x150] sm:$0xff]
        %v652 = vld [vmem:[%s608 + $0x158] sm:$0xff]
        %v653 = vld [vmem:[%s608 + $0x160] sm:$0xff]
        %v654 = vld [vmem:[%s608 + $0x168] sm:$0xff]
        %v655 = vld [vmem:[%s608 + $0x170] sm:$0xff]
        %v656 = vld [vmem:[%s608 + $0x178] sm:$0xff]
        %705 = vrot.lane.b32.xlu0 %v259, 4
        %v706 = vpop.permute.xlu0 %705
        %707 = vrot.lane.b32.xlu0 %v260, 4
        %v708 = vpop.permute.xlu0 %707
        %709 = vrot.lane.b32.xlu0 %v261, 4
        %v710 = vpop.permute.xlu0 %709
        %711 = vrot.lane.b32.xlu0 %v262, 4
        %v712 = vpop.permute.xlu0 %711
        %713 = vrot.lane.b32.xlu0 %v263, 4
        %v714 = vpop.permute.xlu0 %713
        %715 = vrot.lane.b32.xlu0 %v264, 4
        %v716 = vpop.permute.xlu0 %715
        %717 = vrot.lane.b32.xlu0 %v265, 4
        %v718 = vpop.permute.xlu0 %717
        %719 = vrot.lane.b32.xlu0 %v266, 4
        %v720 = vpop.permute.xlu0 %719
        %721 = vrot.lane.b32.xlu0 %v267, 4
        %v722 = vpop.permute.xlu0 %721
        %723 = vrot.lane.b32.xlu0 %v268, 4
        %v724 = vpop.permute.xlu0 %723
        %725 = vrot.lane.b32.xlu0 %v269, 4
        %v726 = vpop.permute.xlu0 %725
        %727 = vrot.lane.b32.xlu0 %v270, 4
        %v728 = vpop.permute.xlu0 %727
        %729 = vrot.lane.b32.xlu0 %v271, 4
        %v730 = vpop.permute.xlu0 %729
        %731 = vrot.lane.b32.xlu0 %v272, 4
        %v732 = vpop.permute.xlu0 %731
        %733 = vrot.lane.b32.xlu0 %v273, 4
        %v734 = vpop.permute.xlu0 %733
        %735 = vrot.lane.b32.xlu0 %v274, 4
        %v736 = vpop.permute.xlu0 %735
        %737 = vrot.lane.b32.xlu0 %v275, 4
        %v738 = vpop.permute.xlu0 %737
        %739 = vrot.lane.b32.xlu0 %v276, 4
        %v740 = vpop.permute.xlu0 %739
        %741 = vrot.lane.b32.xlu0 %v277, 4
        %v742 = vpop.permute.xlu0 %741
        %743 = vrot.lane.b32.xlu0 %v278, 4
        %v744 = vpop.permute.xlu0 %743
        %745 = vrot.lane.b32.xlu0 %v279, 4
        %v746 = vpop.permute.xlu0 %745
        %747 = vrot.lane.b32.xlu0 %v280, 4
        %v748 = vpop.permute.xlu0 %747
        %749 = vrot.lane.b32.xlu0 %v281, 4
        %v750 = vpop.permute.xlu0 %749
        %751 = vrot.lane.b32.xlu0 %v282, 4
        %v752 = vpop.permute.xlu0 %751
        %753 = vrot.lane.b32.xlu0 %v283, 4
        %v754 = vpop.permute.xlu0 %753
        %755 = vrot.lane.b32.xlu0 %v284, 4
        %v756 = vpop.permute.xlu0 %755
        %757 = vrot.lane.b32.xlu0 %v285, 4
        %v758 = vpop.permute.xlu0 %757
        %759 = vrot.lane.b32.xlu0 %v286, 4
        %v760 = vpop.permute.xlu0 %759
        %761 = vrot.lane.b32.xlu0 %v287, 4
        %v762 = vpop.permute.xlu0 %761
        %763 = vrot.lane.b32.xlu0 %v288, 4
        %v764 = vpop.permute.xlu0 %763
        %765 = vrot.lane.b32.xlu0 %v289, 4
        %v766 = vpop.permute.xlu0 %765
        %767 = vrot.lane.b32.xlu0 %v290, 4
        %v768 = vpop.permute.xlu0 %767
        %769 = vrot.lane.b32.xlu0 %v291, 4
        %v770 = vpop.permute.xlu0 %769
        %771 = vrot.lane.b32.xlu0 %v292, 4
        %v772 = vpop.permute.xlu0 %771
        %773 = vrot.lane.b32.xlu0 %v293, 4
        %v774 = vpop.permute.xlu0 %773
        %775 = vrot.lane.b32.xlu0 %v294, 4
        %v776 = vpop.permute.xlu0 %775
        %777 = vrot.lane.b32.xlu0 %v295, 4
        %v778 = vpop.permute.xlu0 %777
        %779 = vrot.lane.b32.xlu0 %v296, 4
        %v780 = vpop.permute.xlu0 %779
        %781 = vrot.lane.b32.xlu0 %v297, 4
        %v782 = vpop.permute.xlu0 %781
        %783 = vrot.lane.b32.xlu0 %v298, 4
        %v784 = vpop.permute.xlu0 %783
        %785 = vrot.lane.b32.xlu0 %v299, 4
        %v786 = vpop.permute.xlu0 %785
        %787 = vrot.lane.b32.xlu0 %v300, 4
        %v788 = vpop.permute.xlu0 %787
        %789 = vrot.lane.b32.xlu0 %v301, 4
        %v790 = vpop.permute.xlu0 %789
        %791 = vrot.lane.b32.xlu0 %v302, 4
        %v792 = vpop.permute.xlu0 %791
        %793 = vrot.lane.b32.xlu0 %v303, 4
        %v794 = vpop.permute.xlu0 %793
        %795 = vrot.lane.b32.xlu0 %v304, 4
        %v796 = vpop.permute.xlu0 %795
        %797 = vrot.lane.b32.xlu0 %v305, 4
        %v798 = vpop.permute.xlu0 %797
        %799 = vrot.lane.b32.xlu0 %v306, 4
        %v800 = vpop.permute.xlu0 %799
        %897 = vrot.lane.b32.xlu0 %v309, 8
        %v898 = vpop.permute.xlu0 %897
        %899 = vrot.lane.b32.xlu0 %v310, 8
        %v900 = vpop.permute.xlu0 %899
        %901 = vrot.lane.b32.xlu0 %v311, 8
        %v902 = vpop.permute.xlu0 %901
        %903 = vrot.lane.b32.xlu0 %v312, 8
        %v904 = vpop.permute.xlu0 %903
        %905 = vrot.lane.b32.xlu0 %v313, 8
        %v906 = vpop.permute.xlu0 %905
        %907 = vrot.lane.b32.xlu0 %v314, 8
        %v908 = vpop.permute.xlu0 %907
        %909 = vrot.lane.b32.xlu0 %v315, 8
        %v910 = vpop.permute.xlu0 %909
        %911 = vrot.lane.b32.xlu0 %v316, 8
        %v912 = vpop.permute.xlu0 %911
        %913 = vrot.lane.b32.xlu0 %v317, 8
        %v914 = vpop.permute.xlu0 %913
        %915 = vrot.lane.b32.xlu0 %v318, 8
        %v916 = vpop.permute.xlu0 %915
        %917 = vrot.lane.b32.xlu0 %v319, 8
        %v918 = vpop.permute.xlu0 %917
        %919 = vrot.lane.b32.xlu0 %v320, 8
        %v920 = vpop.permute.xlu0 %919
        %921 = vrot.lane.b32.xlu0 %v321, 8
        %v922 = vpop.permute.xlu0 %921
        %923 = vrot.lane.b32.xlu0 %v322, 8
        %v924 = vpop.permute.xlu0 %923
        %925 = vrot.lane.b32.xlu0 %v323, 8
        %v926 = vpop.permute.xlu0 %925
        %927 = vrot.lane.b32.xlu0 %v324, 8
        %v928 = vpop.permute.xlu0 %927
        %929 = vrot.lane.b32.xlu0 %v325, 8
        %v930 = vpop.permute.xlu0 %929
        %931 = vrot.lane.b32.xlu0 %v326, 8
        %v932 = vpop.permute.xlu0 %931
        %933 = vrot.lane.b32.xlu0 %v327, 8
        %v934 = vpop.permute.xlu0 %933
        %935 = vrot.lane.b32.xlu0 %v328, 8
        %v936 = vpop.permute.xlu0 %935
        %937 = vrot.lane.b32.xlu0 %v329, 8
        %v938 = vpop.permute.xlu0 %937
        %939 = vrot.lane.b32.xlu0 %v330, 8
        %v940 = vpop.permute.xlu0 %939
        %941 = vrot.lane.b32.xlu0 %v331, 8
        %v942 = vpop.permute.xlu0 %941
        %943 = vrot.lane.b32.xlu0 %v332, 8
        %v944 = vpop.permute.xlu0 %943
        %945 = vrot.lane.b32.xlu0 %v333, 8
        %v946 = vpop.permute.xlu0 %945
        %947 = vrot.lane.b32.xlu0 %v334, 8
        %v948 = vpop.permute.xlu0 %947
        %949 = vrot.lane.b32.xlu0 %v335, 8
        %v950 = vpop.permute.xlu0 %949
        %951 = vrot.lane.b32.xlu0 %v336, 8
        %v952 = vpop.permute.xlu0 %951
        %953 = vrot.lane.b32.xlu0 %v337, 8
        %v954 = vpop.permute.xlu0 %953
        %955 = vrot.lane.b32.xlu0 %v338, 8
        %v956 = vpop.permute.xlu0 %955
        %957 = vrot.lane.b32.xlu0 %v339, 8
        %v958 = vpop.permute.xlu0 %957
        %959 = vrot.lane.b32.xlu0 %v340, 8
        %v960 = vpop.permute.xlu0 %959
        %961 = vrot.lane.b32.xlu0 %v341, 8
        %v962 = vpop.permute.xlu0 %961
        %963 = vrot.lane.b32.xlu0 %v342, 8
        %v964 = vpop.permute.xlu0 %963
        %965 = vrot.lane.b32.xlu0 %v343, 8
        %v966 = vpop.permute.xlu0 %965
        %967 = vrot.lane.b32.xlu0 %v344, 8
        %v968 = vpop.permute.xlu0 %967
        %969 = vrot.lane.b32.xlu0 %v345, 8
        %v970 = vpop.permute.xlu0 %969
        %971 = vrot.lane.b32.xlu0 %v346, 8
        %v972 = vpop.permute.xlu0 %971
        %973 = vrot.lane.b32.xlu0 %v347, 8
        %v974 = vpop.permute.xlu0 %973
        %975 = vrot.lane.b32.xlu0 %v348, 8
        %v976 = vpop.permute.xlu0 %975
        %977 = vrot.lane.b32.xlu0 %v349, 8
        %v978 = vpop.permute.xlu0 %977
        %979 = vrot.lane.b32.xlu0 %v350, 8
        %v980 = vpop.permute.xlu0 %979
        %981 = vrot.lane.b32.xlu0 %v351, 8
        %v982 = vpop.permute.xlu0 %981
        %983 = vrot.lane.b32.xlu0 %v352, 8
        %v984 = vpop.permute.xlu0 %983
        %985 = vrot.lane.b32.xlu0 %v353, 8
        %v986 = vpop.permute.xlu0 %985
        %987 = vrot.lane.b32.xlu0 %v354, 8
        %v988 = vpop.permute.xlu0 %987
        %989 = vrot.lane.b32.xlu0 %v355, 8
        %v990 = vpop.permute.xlu0 %989
        %991 = vrot.lane.b32.xlu0 %v356, 8
        %v992 = vpop.permute.xlu0 %991
        %1089 = vrot.lane.b32.xlu0 %v359, 12
        %v1090 = vpop.permute.xlu0 %1089
        %1091 = vrot.lane.b32.xlu0 %v360, 12
        %v1092 = vpop.permute.xlu0 %1091
        %1093 = vrot.lane.b32.xlu0 %v361, 12
        %v1094 = vpop.permute.xlu0 %1093
        %1095 = vrot.lane.b32.xlu0 %v362, 12
        %v1096 = vpop.permute.xlu0 %1095
        %1097 = vrot.lane.b32.xlu0 %v363, 12
        %v1098 = vpop.permute.xlu0 %1097
        %1099 = vrot.lane.b32.xlu0 %v364, 12
        %v1100 = vpop.permute.xlu0 %1099
        %1101 = vrot.lane.b32.xlu0 %v365, 12
        %v1102 = vpop.permute.xlu0 %1101
        %1103 = vrot.lane.b32.xlu0 %v366, 12
        %v1104 = vpop.permute.xlu0 %1103
        %1105 = vrot.lane.b32.xlu0 %v367, 12
        %v1106 = vpop.permute.xlu0 %1105
        %1107 = vrot.lane.b32.xlu0 %v368, 12
        %v1108 = vpop.permute.xlu0 %1107
        %1109 = vrot.lane.b32.xlu0 %v369, 12
        %v1110 = vpop.permute.xlu0 %1109
        %1111 = vrot.lane.b32.xlu0 %v370, 12
        %v1112 = vpop.permute.xlu0 %1111
        %1113 = vrot.lane.b32.xlu0 %v371, 12
        %v1114 = vpop.permute.xlu0 %1113
        %1115 = vrot.lane.b32.xlu0 %v372, 12
        %v1116 = vpop.permute.xlu0 %1115
        %1117 = vrot.lane.b32.xlu0 %v373, 12
        %v1118 = vpop.permute.xlu0 %1117
        %1119 = vrot.lane.b32.xlu0 %v374, 12
        %v1120 = vpop.permute.xlu0 %1119
        %1121 = vrot.lane.b32.xlu0 %v375, 12
        %v1122 = vpop.permute.xlu0 %1121
        %1123 = vrot.lane.b32.xlu0 %v376, 12
        %v1124 = vpop.permute.xlu0 %1123
        %1125 = vrot.lane.b32.xlu0 %v377, 12
        %v1126 = vpop.permute.xlu0 %1125
        %1127 = vrot.lane.b32.xlu0 %v378, 12
        %v1128 = vpop.permute.xlu0 %1127
        %1129 = vrot.lane.b32.xlu0 %v379, 12
        %v1130 = vpop.permute.xlu0 %1129
        %1131 = vrot.lane.b32.xlu0 %v380, 12
        %v1132 = vpop.permute.xlu0 %1131
        %1133 = vrot.lane.b32.xlu0 %v381, 12
        %v1134 = vpop.permute.xlu0 %1133
        %1135 = vrot.lane.b32.xlu0 %v382, 12
        %v1136 = vpop.permute.xlu0 %1135
        %1137 = vrot.lane.b32.xlu0 %v383, 12
        %v1138 = vpop.permute.xlu0 %1137
        %1139 = vrot.lane.b32.xlu0 %v384, 12
        %v1140 = vpop.permute.xlu0 %1139
        %1141 = vrot.lane.b32.xlu0 %v385, 12
        %v1142 = vpop.permute.xlu0 %1141
        %1143 = vrot.lane.b32.xlu0 %v386, 12
        %v1144 = vpop.permute.xlu0 %1143
        %1145 = vrot.lane.b32.xlu0 %v387, 12
        %v1146 = vpop.permute.xlu0 %1145
        %1147 = vrot.lane.b32.xlu0 %v388, 12
        %v1148 = vpop.permute.xlu0 %1147
        %1149 = vrot.lane.b32.xlu0 %v389, 12
        %v1150 = vpop.permute.xlu0 %1149
        %1151 = vrot.lane.b32.xlu0 %v390, 12
        %v1152 = vpop.permute.xlu0 %1151
        %1153 = vrot.lane.b32.xlu0 %v391, 12
        %v1154 = vpop.permute.xlu0 %1153
        %1155 = vrot.lane.b32.xlu0 %v392, 12
        %v1156 = vpop.permute.xlu0 %1155
        %1157 = vrot.lane.b32.xlu0 %v393, 12
        %v1158 = vpop.permute.xlu0 %1157
        %1159 = vrot.lane.b32.xlu0 %v394, 12
        %v1160 = vpop.permute.xlu0 %1159
        %1161 = vrot.lane.b32.xlu0 %v395, 12
        %v1162 = vpop.permute.xlu0 %1161
        %1163 = vrot.lane.b32.xlu0 %v396, 12
        %v1164 = vpop.permute.xlu0 %1163
        %1165 = vrot.lane.b32.xlu0 %v397, 12
        %v1166 = vpop.permute.xlu0 %1165
        %1167 = vrot.lane.b32.xlu0 %v398, 12
        %v1168 = vpop.permute.xlu0 %1167
        %1169 = vrot.lane.b32.xlu0 %v399, 12
        %v1170 = vpop.permute.xlu0 %1169
        %1171 = vrot.lane.b32.xlu0 %v400, 12
        %v1172 = vpop.permute.xlu0 %1171
        %1173 = vrot.lane.b32.xlu0 %v401, 12
        %v1174 = vpop.permute.xlu0 %1173
        %1175 = vrot.lane.b32.xlu0 %v402, 12
        %v1176 = vpop.permute.xlu0 %1175
        %1177 = vrot.lane.b32.xlu0 %v403, 12
        %v1178 = vpop.permute.xlu0 %1177
        %1179 = vrot.lane.b32.xlu0 %v404, 12
        %v1180 = vpop.permute.xlu0 %1179
        %1181 = vrot.lane.b32.xlu0 %v405, 12
        %v1182 = vpop.permute.xlu0 %1181
        %1183 = vrot.lane.b32.xlu0 %v406, 12
        %v1184 = vpop.permute.xlu0 %1183
        %1281 = vrot.lane.b32.xlu0 %v409, 16
        %v1282 = vpop.permute.xlu0 %1281
        %1283 = vrot.lane.b32.xlu0 %v410, 16
        %v1284 = vpop.permute.xlu0 %1283
        %1285 = vrot.lane.b32.xlu0 %v411, 16
        %v1286 = vpop.permute.xlu0 %1285
        %1287 = vrot.lane.b32.xlu0 %v412, 16
        %v1288 = vpop.permute.xlu0 %1287
        %1289 = vrot.lane.b32.xlu0 %v413, 16
        %v1290 = vpop.permute.xlu0 %1289
        %1291 = vrot.lane.b32.xlu0 %v414, 16
        %v1292 = vpop.permute.xlu0 %1291
        %1293 = vrot.lane.b32.xlu0 %v415, 16
        %v1294 = vpop.permute.xlu0 %1293
        %1295 = vrot.lane.b32.xlu0 %v416, 16
        %v1296 = vpop.permute.xlu0 %1295
        %1297 = vrot.lane.b32.xlu0 %v417, 16
        %v1298 = vpop.permute.xlu0 %1297
        %1299 = vrot.lane.b32.xlu0 %v418, 16
        %v1300 = vpop.permute.xlu0 %1299
        %1301 = vrot.lane.b32.xlu0 %v419, 16
        %v1302 = vpop.permute.xlu0 %1301
        %1303 = vrot.lane.b32.xlu0 %v420, 16
        %v1304 = vpop.permute.xlu0 %1303
        %1305 = vrot.lane.b32.xlu0 %v421, 16
        %v1306 = vpop.permute.xlu0 %1305
        %1307 = vrot.lane.b32.xlu0 %v422, 16
        %v1308 = vpop.permute.xlu0 %1307
        %1309 = vrot.lane.b32.xlu0 %v423, 16
        %v1310 = vpop.permute.xlu0 %1309
        %1311 = vrot.lane.b32.xlu0 %v424, 16
        %v1312 = vpop.permute.xlu0 %1311
        %1313 = vrot.lane.b32.xlu0 %v425, 16
        %v1314 = vpop.permute.xlu0 %1313
        %1315 = vrot.lane.b32.xlu0 %v426, 16
        %v1316 = vpop.permute.xlu0 %1315
        %1317 = vrot.lane.b32.xlu0 %v427, 16
        %v1318 = vpop.permute.xlu0 %1317
        %1319 = vrot.lane.b32.xlu0 %v428, 16
        %v1320 = vpop.permute.xlu0 %1319
        %1321 = vrot.lane.b32.xlu0 %v429, 16
        %v1322 = vpop.permute.xlu0 %1321
        %1323 = vrot.lane.b32.xlu0 %v430, 16
        %v1324 = vpop.permute.xlu0 %1323
        %1325 = vrot.lane.b32.xlu0 %v431, 16
        %v1326 = vpop.permute.xlu0 %1325
        %1327 = vrot.lane.b32.xlu0 %v432, 16
        %v1328 = vpop.permute.xlu0 %1327
        %1329 = vrot.lane.b32.xlu0 %v433, 16
        %v1330 = vpop.permute.xlu0 %1329
        %1331 = vrot.lane.b32.xlu0 %v434, 16
        %v1332 = vpop.permute.xlu0 %1331
        %1333 = vrot.lane.b32.xlu0 %v435, 16
        %v1334 = vpop.permute.xlu0 %1333
        %1335 = vrot.lane.b32.xlu0 %v436, 16
        %v1336 = vpop.permute.xlu0 %1335
        %1337 = vrot.lane.b32.xlu0 %v437, 16
        %v1338 = vpop.permute.xlu0 %1337
        %1339 = vrot.lane.b32.xlu0 %v438, 16
        %v1340 = vpop.permute.xlu0 %1339
        %1341 = vrot.lane.b32.xlu0 %v439, 16
        %v1342 = vpop.permute.xlu0 %1341
        %1343 = vrot.lane.b32.xlu0 %v440, 16
        %v1344 = vpop.permute.xlu0 %1343
        %1345 = vrot.lane.b32.xlu0 %v441, 16
        %v1346 = vpop.permute.xlu0 %1345
        %1347 = vrot.lane.b32.xlu0 %v442, 16
        %v1348 = vpop.permute.xlu0 %1347
        %1349 = vrot.lane.b32.xlu0 %v443, 16
        %v1350 = vpop.permute.xlu0 %1349
        %1351 = vrot.lane.b32.xlu0 %v444, 16
        %v1352 = vpop.permute.xlu0 %1351
        %1353 = vrot.lane.b32.xlu0 %v445, 16
        %v1354 = vpop.permute.xlu0 %1353
        %1355 = vrot.lane.b32.xlu0 %v446, 16
        %v1356 = vpop.permute.xlu0 %1355
        %1357 = vrot.lane.b32.xlu0 %v447, 16
        %v1358 = vpop.permute.xlu0 %1357
        %1359 = vrot.lane.b32.xlu0 %v448, 16
        %v1360 = vpop.permute.xlu0 %1359
        %1361 = vrot.lane.b32.xlu0 %v449, 16
        %v1362 = vpop.permute.xlu0 %1361
        %1363 = vrot.lane.b32.xlu0 %v450, 16
        %v1364 = vpop.permute.xlu0 %1363
        %1365 = vrot.lane.b32.xlu0 %v451, 16
        %v1366 = vpop.permute.xlu0 %1365
        %1367 = vrot.lane.b32.xlu0 %v452, 16
        %v1368 = vpop.permute.xlu0 %1367
        %1369 = vrot.lane.b32.xlu0 %v453, 16
        %v1370 = vpop.permute.xlu0 %1369
        %1371 = vrot.lane.b32.xlu0 %v454, 16
        %v1372 = vpop.permute.xlu0 %1371
        %1373 = vrot.lane.b32.xlu0 %v455, 16
        %v1374 = vpop.permute.xlu0 %1373
        %1375 = vrot.lane.b32.xlu0 %v456, 16
        %v1376 = vpop.permute.xlu0 %1375
        %1473 = vrot.lane.b32.xlu0 %v459, 20
        %v1474 = vpop.permute.xlu0 %1473
        %1475 = vrot.lane.b32.xlu0 %v460, 20
        %v1476 = vpop.permute.xlu0 %1475
        %1477 = vrot.lane.b32.xlu0 %v461, 20
        %v1478 = vpop.permute.xlu0 %1477
        %1479 = vrot.lane.b32.xlu0 %v462, 20
        %v1480 = vpop.permute.xlu0 %1479
        %1481 = vrot.lane.b32.xlu0 %v463, 20
        %v1482 = vpop.permute.xlu0 %1481
        %1483 = vrot.lane.b32.xlu0 %v464, 20
        %v1484 = vpop.permute.xlu0 %1483
        %1485 = vrot.lane.b32.xlu0 %v465, 20
        %v1486 = vpop.permute.xlu0 %1485
        %1487 = vrot.lane.b32.xlu0 %v466, 20
        %v1488 = vpop.permute.xlu0 %1487
        %1489 = vrot.lane.b32.xlu0 %v467, 20
        %v1490 = vpop.permute.xlu0 %1489
        %1491 = vrot.lane.b32.xlu0 %v468, 20
        %v1492 = vpop.permute.xlu0 %1491
        %1493 = vrot.lane.b32.xlu0 %v469, 20
        %v1494 = vpop.permute.xlu0 %1493
        %1495 = vrot.lane.b32.xlu0 %v470, 20
        %v1496 = vpop.permute.xlu0 %1495
        %1497 = vrot.lane.b32.xlu0 %v471, 20
        %v1498 = vpop.permute.xlu0 %1497
        %1499 = vrot.lane.b32.xlu0 %v472, 20
        %v1500 = vpop.permute.xlu0 %1499
        %1501 = vrot.lane.b32.xlu0 %v473, 20
        %v1502 = vpop.permute.xlu0 %1501
        %1503 = vrot.lane.b32.xlu0 %v474, 20
        %v1504 = vpop.permute.xlu0 %1503
        %1505 = vrot.lane.b32.xlu0 %v475, 20
        %v1506 = vpop.permute.xlu0 %1505
        %1507 = vrot.lane.b32.xlu0 %v476, 20
        %v1508 = vpop.permute.xlu0 %1507
        %1509 = vrot.lane.b32.xlu0 %v477, 20
        %v1510 = vpop.permute.xlu0 %1509
        %1511 = vrot.lane.b32.xlu0 %v478, 20
        %v1512 = vpop.permute.xlu0 %1511
        %1513 = vrot.lane.b32.xlu0 %v479, 20
        %v1514 = vpop.permute.xlu0 %1513
        %1515 = vrot.lane.b32.xlu0 %v480, 20
        %v1516 = vpop.permute.xlu0 %1515
        %1517 = vrot.lane.b32.xlu0 %v481, 20
        %v1518 = vpop.permute.xlu0 %1517
        %1519 = vrot.lane.b32.xlu0 %v482, 20
        %v1520 = vpop.permute.xlu0 %1519
        %1521 = vrot.lane.b32.xlu0 %v483, 20
        %v1522 = vpop.permute.xlu0 %1521
        %1523 = vrot.lane.b32.xlu0 %v484, 20
        %v1524 = vpop.permute.xlu0 %1523
        %1525 = vrot.lane.b32.xlu0 %v485, 20
        %v1526 = vpop.permute.xlu0 %1525
        %1527 = vrot.lane.b32.xlu0 %v486, 20
        %v1528 = vpop.permute.xlu0 %1527
        %1529 = vrot.lane.b32.xlu0 %v487, 20
        %v1530 = vpop.permute.xlu0 %1529
        %1531 = vrot.lane.b32.xlu0 %v488, 20
        %v1532 = vpop.permute.xlu0 %1531
        %1533 = vrot.lane.b32.xlu0 %v489, 20
        %v1534 = vpop.permute.xlu0 %1533
        %1535 = vrot.lane.b32.xlu0 %v490, 20
        %v1536 = vpop.permute.xlu0 %1535
        %1537 = vrot.lane.b32.xlu0 %v491, 20
        %v1538 = vpop.permute.xlu0 %1537
        %1539 = vrot.lane.b32.xlu0 %v492, 20
        %v1540 = vpop.permute.xlu0 %1539
        %1541 = vrot.lane.b32.xlu0 %v493, 20
        %v1542 = vpop.permute.xlu0 %1541
        %1543 = vrot.lane.b32.xlu0 %v494, 20
        %v1544 = vpop.permute.xlu0 %1543
        %1545 = vrot.lane.b32.xlu0 %v495, 20
        %v1546 = vpop.permute.xlu0 %1545
        %1547 = vrot.lane.b32.xlu0 %v496, 20
        %v1548 = vpop.permute.xlu0 %1547
        %1549 = vrot.lane.b32.xlu0 %v497, 20
        %v1550 = vpop.permute.xlu0 %1549
        %1551 = vrot.lane.b32.xlu0 %v498, 20
        %v1552 = vpop.permute.xlu0 %1551
        %1553 = vrot.lane.b32.xlu0 %v499, 20
        %v1554 = vpop.permute.xlu0 %1553
        %1555 = vrot.lane.b32.xlu0 %v500, 20
        %v1556 = vpop.permute.xlu0 %1555
        %1557 = vrot.lane.b32.xlu0 %v501, 20
        %v1558 = vpop.permute.xlu0 %1557
        %1559 = vrot.lane.b32.xlu0 %v502, 20
        %v1560 = vpop.permute.xlu0 %1559
        %1561 = vrot.lane.b32.xlu0 %v503, 20
        %v1562 = vpop.permute.xlu0 %1561
        %1563 = vrot.lane.b32.xlu0 %v504, 20
        %v1564 = vpop.permute.xlu0 %1563
        %1565 = vrot.lane.b32.xlu0 %v505, 20
        %v1566 = vpop.permute.xlu0 %1565
        %1567 = vrot.lane.b32.xlu0 %v506, 20
        %v1568 = vpop.permute.xlu0 %1567
        %1665 = vrot.lane.b32.xlu0 %v509, 24
        %v1666 = vpop.permute.xlu0 %1665
        %1667 = vrot.lane.b32.xlu0 %v510, 24
        %v1668 = vpop.permute.xlu0 %1667
        %1669 = vrot.lane.b32.xlu0 %v511, 24
        %v1670 = vpop.permute.xlu0 %1669
        %1671 = vrot.lane.b32.xlu0 %v512, 24
        %v1672 = vpop.permute.xlu0 %1671
        %1673 = vrot.lane.b32.xlu0 %v513, 24
        %v1674 = vpop.permute.xlu0 %1673
        %1675 = vrot.lane.b32.xlu0 %v514, 24
        %v1676 = vpop.permute.xlu0 %1675
        %1677 = vrot.lane.b32.xlu0 %v515, 24
        %v1678 = vpop.permute.xlu0 %1677
        %1679 = vrot.lane.b32.xlu0 %v516, 24
        %v1680 = vpop.permute.xlu0 %1679
        %1681 = vrot.lane.b32.xlu0 %v517, 24
        %v1682 = vpop.permute.xlu0 %1681
        %1683 = vrot.lane.b32.xlu0 %v518, 24
        %v1684 = vpop.permute.xlu0 %1683
        %1685 = vrot.lane.b32.xlu0 %v519, 24
        %v1686 = vpop.permute.xlu0 %1685
        %1687 = vrot.lane.b32.xlu0 %v520, 24
        %v1688 = vpop.permute.xlu0 %1687
        %1689 = vrot.lane.b32.xlu0 %v521, 24
        %v1690 = vpop.permute.xlu0 %1689
        %1691 = vrot.lane.b32.xlu0 %v522, 24
        %v1692 = vpop.permute.xlu0 %1691
        %1693 = vrot.lane.b32.xlu0 %v523, 24
        %v1694 = vpop.permute.xlu0 %1693
        %1695 = vrot.lane.b32.xlu0 %v524, 24
        %v1696 = vpop.permute.xlu0 %1695
        %1697 = vrot.lane.b32.xlu0 %v525, 24
        %v1698 = vpop.permute.xlu0 %1697
        %1699 = vrot.lane.b32.xlu0 %v526, 24
        %v1700 = vpop.permute.xlu0 %1699
        %1701 = vrot.lane.b32.xlu0 %v527, 24
        %v1702 = vpop.permute.xlu0 %1701
        %1703 = vrot.lane.b32.xlu0 %v528, 24
        %v1704 = vpop.permute.xlu0 %1703
        %1705 = vrot.lane.b32.xlu0 %v529, 24
        %v1706 = vpop.permute.xlu0 %1705
        %1707 = vrot.lane.b32.xlu0 %v530, 24
        %v1708 = vpop.permute.xlu0 %1707
        %1709 = vrot.lane.b32.xlu0 %v531, 24
        %v1710 = vpop.permute.xlu0 %1709
        %1711 = vrot.lane.b32.xlu0 %v532, 24
        %v1712 = vpop.permute.xlu0 %1711
        %1713 = vrot.lane.b32.xlu0 %v533, 24
        %v1714 = vpop.permute.xlu0 %1713
        %1715 = vrot.lane.b32.xlu0 %v534, 24
        %v1716 = vpop.permute.xlu0 %1715
        %1717 = vrot.lane.b32.xlu0 %v535, 24
        %v1718 = vpop.permute.xlu0 %1717
        %1719 = vrot.lane.b32.xlu0 %v536, 24
        %v1720 = vpop.permute.xlu0 %1719
        %1721 = vrot.lane.b32.xlu0 %v537, 24
        %v1722 = vpop.permute.xlu0 %1721
        %1723 = vrot.lane.b32.xlu0 %v538, 24
        %v1724 = vpop.permute.xlu0 %1723
        %1725 = vrot.lane.b32.xlu0 %v539, 24
        %v1726 = vpop.permute.xlu0 %1725
        %1727 = vrot.lane.b32.xlu0 %v540, 24
        %v1728 = vpop.permute.xlu0 %1727
        %1729 = vrot.lane.b32.xlu0 %v541, 24
        %v1730 = vpop.permute.xlu0 %1729
        %1731 = vrot.lane.b32.xlu0 %v542, 24
        %v1732 = vpop.permute.xlu0 %1731
        %1733 = vrot.lane.b32.xlu0 %v543, 24
        %v1734 = vpop.permute.xlu0 %1733
        %1735 = vrot.lane.b32.xlu0 %v544, 24
        %v1736 = vpop.permute.xlu0 %1735
        %1737 = vrot.lane.b32.xlu0 %v545, 24
        %v1738 = vpop.permute.xlu0 %1737
        %1739 = vrot.lane.b32.xlu0 %v546, 24
        %v1740 = vpop.permute.xlu0 %1739
        %1741 = vrot.lane.b32.xlu0 %v547, 24
        %v1742 = vpop.permute.xlu0 %1741
        %1743 = vrot.lane.b32.xlu0 %v548, 24
        %v1744 = vpop.permute.xlu0 %1743
        %1745 = vrot.lane.b32.xlu0 %v549, 24
        %v1746 = vpop.permute.xlu0 %1745
        %1747 = vrot.lane.b32.xlu0 %v550, 24
        %v1748 = vpop.permute.xlu0 %1747
        %1749 = vrot.lane.b32.xlu0 %v551, 24
        %v1750 = vpop.permute.xlu0 %1749
        %1751 = vrot.lane.b32.xlu0 %v552, 24
        %v1752 = vpop.permute.xlu0 %1751
        %1753 = vrot.lane.b32.xlu0 %v553, 24
        %v1754 = vpop.permute.xlu0 %1753
        %1755 = vrot.lane.b32.xlu0 %v554, 24
        %v1756 = vpop.permute.xlu0 %1755
        %1757 = vrot.lane.b32.xlu0 %v555, 24
        %v1758 = vpop.permute.xlu0 %1757
        %1759 = vrot.lane.b32.xlu0 %v556, 24
        %v1760 = vpop.permute.xlu0 %1759
        %1857 = vrot.lane.b32.xlu0 %v559, 28
        %v1858 = vpop.permute.xlu0 %1857
        %1859 = vrot.lane.b32.xlu0 %v560, 28
        %v1860 = vpop.permute.xlu0 %1859
        %1861 = vrot.lane.b32.xlu0 %v561, 28
        %v1862 = vpop.permute.xlu0 %1861
        %1863 = vrot.lane.b32.xlu0 %v562, 28
        %v1864 = vpop.permute.xlu0 %1863
        %1865 = vrot.lane.b32.xlu0 %v563, 28
        %v1866 = vpop.permute.xlu0 %1865
        %1867 = vrot.lane.b32.xlu0 %v564, 28
        %v1868 = vpop.permute.xlu0 %1867
        %1869 = vrot.lane.b32.xlu0 %v565, 28
        %v1870 = vpop.permute.xlu0 %1869
        %1871 = vrot.lane.b32.xlu0 %v566, 28
        %v1872 = vpop.permute.xlu0 %1871
        %1873 = vrot.lane.b32.xlu0 %v567, 28
        %v1874 = vpop.permute.xlu0 %1873
        %1875 = vrot.lane.b32.xlu0 %v568, 28
        %v1876 = vpop.permute.xlu0 %1875
        %1877 = vrot.lane.b32.xlu0 %v569, 28
        %v1878 = vpop.permute.xlu0 %1877
        %1879 = vrot.lane.b32.xlu0 %v570, 28
        %v1880 = vpop.permute.xlu0 %1879
        %1881 = vrot.lane.b32.xlu0 %v571, 28
        %v1882 = vpop.permute.xlu0 %1881
        %1883 = vrot.lane.b32.xlu0 %v572, 28
        %v1884 = vpop.permute.xlu0 %1883
        %1885 = vrot.lane.b32.xlu0 %v573, 28
        %v1886 = vpop.permute.xlu0 %1885
        %1887 = vrot.lane.b32.xlu0 %v574, 28
        %v1888 = vpop.permute.xlu0 %1887
        %1889 = vrot.lane.b32.xlu0 %v575, 28
        %v1890 = vpop.permute.xlu0 %1889
        %1891 = vrot.lane.b32.xlu0 %v576, 28
        %v1892 = vpop.permute.xlu0 %1891
        %1893 = vrot.lane.b32.xlu0 %v577, 28
        %v1894 = vpop.permute.xlu0 %1893
        %1895 = vrot.lane.b32.xlu0 %v578, 28
        %v1896 = vpop.permute.xlu0 %1895
        %1897 = vrot.lane.b32.xlu0 %v579, 28
        %v1898 = vpop.permute.xlu0 %1897
        %1899 = vrot.lane.b32.xlu0 %v580, 28
        %v1900 = vpop.permute.xlu0 %1899
        %1901 = vrot.lane.b32.xlu0 %v581, 28
        %v1902 = vpop.permute.xlu0 %1901
        %1903 = vrot.lane.b32.xlu0 %v582, 28
        %v1904 = vpop.permute.xlu0 %1903
        %1905 = vrot.lane.b32.xlu0 %v583, 28
        %v1906 = vpop.permute.xlu0 %1905
        %1907 = vrot.lane.b32.xlu0 %v584, 28
        %v1908 = vpop.permute.xlu0 %1907
        %1909 = vrot.lane.b32.xlu0 %v585, 28
        %v1910 = vpop.permute.xlu0 %1909
        %1911 = vrot.lane.b32.xlu0 %v586, 28
        %v1912 = vpop.permute.xlu0 %1911
        %1913 = vrot.lane.b32.xlu0 %v587, 28
        %v1914 = vpop.permute.xlu0 %1913
        %1915 = vrot.lane.b32.xlu0 %v588, 28
        %v1916 = vpop.permute.xlu0 %1915
        %1917 = vrot.lane.b32.xlu0 %v589, 28
        %v1918 = vpop.permute.xlu0 %1917
        %1919 = vrot.lane.b32.xlu0 %v590, 28
        %v1920 = vpop.permute.xlu0 %1919
        %1921 = vrot.lane.b32.xlu0 %v591, 28
        %v1922 = vpop.permute.xlu0 %1921
        %1923 = vrot.lane.b32.xlu0 %v592, 28
        %v1924 = vpop.permute.xlu0 %1923
        %1925 = vrot.lane.b32.xlu0 %v593, 28
        %v1926 = vpop.permute.xlu0 %1925
        %1927 = vrot.lane.b32.xlu0 %v594, 28
        %v1928 = vpop.permute.xlu0 %1927
        %1929 = vrot.lane.b32.xlu0 %v595, 28
        %v1930 = vpop.permute.xlu0 %1929
        %1931 = vrot.lane.b32.xlu0 %v596, 28
        %v1932 = vpop.permute.xlu0 %1931
        %1933 = vrot.lane.b32.xlu0 %v597, 28
        %v1934 = vpop.permute.xlu0 %1933
        %1935 = vrot.lane.b32.xlu0 %v598, 28
        %v1936 = vpop.permute.xlu0 %1935
        %1937 = vrot.lane.b32.xlu0 %v599, 28
        %v1938 = vpop.permute.xlu0 %1937
        %1939 = vrot.lane.b32.xlu0 %v600, 28
        %v1940 = vpop.permute.xlu0 %1939
        %1941 = vrot.lane.b32.xlu0 %v601, 28
        %v1942 = vpop.permute.xlu0 %1941
        %1943 = vrot.lane.b32.xlu0 %v602, 28
        %v1944 = vpop.permute.xlu0 %1943
        %1945 = vrot.lane.b32.xlu0 %v603, 28
        %v1946 = vpop.permute.xlu0 %1945
        %1947 = vrot.lane.b32.xlu0 %v604, 28
        %v1948 = vpop.permute.xlu0 %1947
        %1949 = vrot.lane.b32.xlu0 %v605, 28
        %v1950 = vpop.permute.xlu0 %1949
        %1951 = vrot.lane.b32.xlu0 %v606, 28
        %v1952 = vpop.permute.xlu0 %1951
        %2049 = vrot.lane.b32.xlu0 %v609, 32
        %v2050 = vpop.permute.xlu0 %2049
        %2051 = vrot.lane.b32.xlu0 %v610, 32
        %v2052 = vpop.permute.xlu0 %2051
        %2053 = vrot.lane.b32.xlu0 %v611, 32
        %v2054 = vpop.permute.xlu0 %2053
        %2055 = vrot.lane.b32.xlu0 %v612, 32
        %v2056 = vpop.permute.xlu0 %2055
        %2057 = vrot.lane.b32.xlu0 %v613, 32
        %v2058 = vpop.permute.xlu0 %2057
        %2059 = vrot.lane.b32.xlu0 %v614, 32
        %v2060 = vpop.permute.xlu0 %2059
        %2061 = vrot.lane.b32.xlu0 %v615, 32
        %v2062 = vpop.permute.xlu0 %2061
        %2063 = vrot.lane.b32.xlu0 %v616, 32
        %v2064 = vpop.permute.xlu0 %2063
        %2065 = vrot.lane.b32.xlu0 %v617, 32
        %v2066 = vpop.permute.xlu0 %2065
        %2067 = vrot.lane.b32.xlu0 %v618, 32
        %v2068 = vpop.permute.xlu0 %2067
        %2069 = vrot.lane.b32.xlu0 %v619, 32
        %v2070 = vpop.permute.xlu0 %2069
        %2071 = vrot.lane.b32.xlu0 %v620, 32
        %v2072 = vpop.permute.xlu0 %2071
        %2073 = vrot.lane.b32.xlu0 %v621, 32
        %v2074 = vpop.permute.xlu0 %2073
        %2075 = vrot.lane.b32.xlu0 %v622, 32
        %v2076 = vpop.permute.xlu0 %2075
        %2077 = vrot.lane.b32.xlu0 %v623, 32
        %v2078 = vpop.permute.xlu0 %2077
        %2079 = vrot.lane.b32.xlu0 %v624, 32
        %v2080 = vpop.permute.xlu0 %2079
        %2081 = vrot.lane.b32.xlu0 %v625, 32
        %v2082 = vpop.permute.xlu0 %2081
        %2083 = vrot.lane.b32.xlu0 %v626, 32
        %v2084 = vpop.permute.xlu0 %2083
        %2085 = vrot.lane.b32.xlu0 %v627, 32
        %v2086 = vpop.permute.xlu0 %2085
        %2087 = vrot.lane.b32.xlu0 %v628, 32
        %v2088 = vpop.permute.xlu0 %2087
        %2089 = vrot.lane.b32.xlu0 %v629, 32
        %v2090 = vpop.permute.xlu0 %2089
        %2091 = vrot.lane.b32.xlu0 %v630, 32
        %v2092 = vpop.permute.xlu0 %2091
        %2093 = vrot.lane.b32.xlu0 %v631, 32
        %v2094 = vpop.permute.xlu0 %2093
        %2095 = vrot.lane.b32.xlu0 %v632, 32
        %v2096 = vpop.permute.xlu0 %2095
        %2097 = vrot.lane.b32.xlu0 %v633, 32
        %v2098 = vpop.permute.xlu0 %2097
        %2099 = vrot.lane.b32.xlu0 %v634, 32
        %v2100 = vpop.permute.xlu0 %2099
        %2101 = vrot.lane.b32.xlu0 %v635, 32
        %v2102 = vpop.permute.xlu0 %2101
        %2103 = vrot.lane.b32.xlu0 %v636, 32
        %v2104 = vpop.permute.xlu0 %2103
        %2105 = vrot.lane.b32.xlu0 %v637, 32
        %v2106 = vpop.permute.xlu0 %2105
        %2107 = vrot.lane.b32.xlu0 %v638, 32
        %v2108 = vpop.permute.xlu0 %2107
        %2109 = vrot.lane.b32.xlu0 %v639, 32
        %v2110 = vpop.permute.xlu0 %2109
        %2111 = vrot.lane.b32.xlu0 %v640, 32
        %v2112 = vpop.permute.xlu0 %2111
        %2113 = vrot.lane.b32.xlu0 %v641, 32
        %v2114 = vpop.permute.xlu0 %2113
        %2115 = vrot.lane.b32.xlu0 %v642, 32
        %v2116 = vpop.permute.xlu0 %2115
        %2117 = vrot.lane.b32.xlu0 %v643, 32
        %v2118 = vpop.permute.xlu0 %2117
        %2119 = vrot.lane.b32.xlu0 %v644, 32
        %v2120 = vpop.permute.xlu0 %2119
        %2121 = vrot.lane.b32.xlu0 %v645, 32
        %v2122 = vpop.permute.xlu0 %2121
        %2123 = vrot.lane.b32.xlu0 %v646, 32
        %v2124 = vpop.permute.xlu0 %2123
        %2125 = vrot.lane.b32.xlu0 %v647, 32
        %v2126 = vpop.permute.xlu0 %2125
        %2127 = vrot.lane.b32.xlu0 %v648, 32
        %v2128 = vpop.permute.xlu0 %2127
        %2129 = vrot.lane.b32.xlu0 %v649, 32
        %v2130 = vpop.permute.xlu0 %2129
        %2131 = vrot.lane.b32.xlu0 %v650, 32
        %v2132 = vpop.permute.xlu0 %2131
        %2133 = vrot.lane.b32.xlu0 %v651, 32
        %v2134 = vpop.permute.xlu0 %2133
        %2135 = vrot.lane.b32.xlu0 %v652, 32
        %v2136 = vpop.permute.xlu0 %2135
        %2137 = vrot.lane.b32.xlu0 %v653, 32
        %v2138 = vpop.permute.xlu0 %2137
        %2139 = vrot.lane.b32.xlu0 %v654, 32
        %v2140 = vpop.permute.xlu0 %2139
        %2141 = vrot.lane.b32.xlu0 %v655, 32
        %v2142 = vpop.permute.xlu0 %2141
        %2143 = vrot.lane.b32.xlu0 %v656, 32
        %v2144 = vpop.permute.xlu0 %2143
        %vm2193 = vcmask 31744
        %v2194 = vsel %vm2193, %v209, %v706
        %v2195 = vsel %vm2193, %v210, %v708
        %v2196 = vsel %vm2193, %v211, %v710
        %v2197 = vsel %vm2193, %v212, %v712
        %v2198 = vsel %vm2193, %v213, %v714
        %v2199 = vsel %vm2193, %v214, %v716
        %v2200 = vsel %vm2193, %v215, %v718
        %v2201 = vsel %vm2193, %v216, %v720
        %v2202 = vsel %vm2193, %v217, %v722
        %v2203 = vsel %vm2193, %v218, %v724
        %v2204 = vsel %vm2193, %v219, %v726
        %v2205 = vsel %vm2193, %v220, %v728
        %v2206 = vsel %vm2193, %v221, %v730
        %v2207 = vsel %vm2193, %v222, %v732
        %v2208 = vsel %vm2193, %v223, %v734
        %v2209 = vsel %vm2193, %v224, %v736
        %v2210 = vsel %vm2193, %v225, %v738
        %v2211 = vsel %vm2193, %v226, %v740
        %v2212 = vsel %vm2193, %v227, %v742
        %v2213 = vsel %vm2193, %v228, %v744
        %v2214 = vsel %vm2193, %v229, %v746
        %v2215 = vsel %vm2193, %v230, %v748
        %v2216 = vsel %vm2193, %v231, %v750
        %v2217 = vsel %vm2193, %v232, %v752
        %v2218 = vsel %vm2193, %v233, %v754
        %v2219 = vsel %vm2193, %v234, %v756
        %v2220 = vsel %vm2193, %v235, %v758
        %v2221 = vsel %vm2193, %v236, %v760
        %v2222 = vsel %vm2193, %v237, %v762
        %v2223 = vsel %vm2193, %v238, %v764
        %v2224 = vsel %vm2193, %v239, %v766
        %v2225 = vsel %vm2193, %v240, %v768
        %v2226 = vsel %vm2193, %v241, %v770
        %v2227 = vsel %vm2193, %v242, %v772
        %v2228 = vsel %vm2193, %v243, %v774
        %v2229 = vsel %vm2193, %v244, %v776
        %v2230 = vsel %vm2193, %v245, %v778
        %v2231 = vsel %vm2193, %v246, %v780
        %v2232 = vsel %vm2193, %v247, %v782
        %v2233 = vsel %vm2193, %v248, %v784
        %v2234 = vsel %vm2193, %v249, %v786
        %v2235 = vsel %vm2193, %v250, %v788
        %v2236 = vsel %vm2193, %v251, %v790
        %v2237 = vsel %vm2193, %v252, %v792
        %v2238 = vsel %vm2193, %v253, %v794
        %v2239 = vsel %vm2193, %v254, %v796
        %v2240 = vsel %vm2193, %v255, %v798
        %v2241 = vsel %vm2193, %v256, %v800
        %vm2242 = vcmask 64512
        %v2243 = vsel %vm2242, %v2194, %v898
        %v2244 = vsel %vm2242, %v2195, %v900
        %v2245 = vsel %vm2242, %v2196, %v902
        %v2246 = vsel %vm2242, %v2197, %v904
        %v2247 = vsel %vm2242, %v2198, %v906
        %v2248 = vsel %vm2242, %v2199, %v908
        %v2249 = vsel %vm2242, %v2200, %v910
        %v2250 = vsel %vm2242, %v2201, %v912
        %v2251 = vsel %vm2242, %v2202, %v914
        %v2252 = vsel %vm2242, %v2203, %v916
        %v2253 = vsel %vm2242, %v2204, %v918
        %v2254 = vsel %vm2242, %v2205, %v920
        %v2255 = vsel %vm2242, %v2206, %v922
        %v2256 = vsel %vm2242, %v2207, %v924
        %v2257 = vsel %vm2242, %v2208, %v926
        %v2258 = vsel %vm2242, %v2209, %v928
        %v2259 = vsel %vm2242, %v2210, %v930
        %v2260 = vsel %vm2242, %v2211, %v932
        %v2261 = vsel %vm2242, %v2212, %v934
        %v2262 = vsel %vm2242, %v2213, %v936
        %v2263 = vsel %vm2242, %v2214, %v938
        %v2264 = vsel %vm2242, %v2215, %v940
        %v2265 = vsel %vm2242, %v2216, %v942
        %v2266 = vsel %vm2242, %v2217, %v944
        %v2267 = vsel %vm2242, %v2218, %v946
        %v2268 = vsel %vm2242, %v2219, %v948
        %v2269 = vsel %vm2242, %v2220, %v950
        %v2270 = vsel %vm2242, %v2221, %v952
        %v2271 = vsel %vm2242, %v2222, %v954
        %v2272 = vsel %vm2242, %v2223, %v956
        %v2273 = vsel %vm2242, %v2224, %v958
        %v2274 = vsel %vm2242, %v2225, %v960
        %v2275 = vsel %vm2242, %v2226, %v962
        %v2276 = vsel %vm2242, %v2227, %v964
        %v2277 = vsel %vm2242, %v2228, %v966
        %v2278 = vsel %vm2242, %v2229, %v968
        %v2279 = vsel %vm2242, %v2230, %v970
        %v2280 = vsel %vm2242, %v2231, %v972
        %v2281 = vsel %vm2242, %v2232, %v974
        %v2282 = vsel %vm2242, %v2233, %v976
        %v2283 = vsel %vm2242, %v2234, %v978
        %v2284 = vsel %vm2242, %v2235, %v980
        %v2285 = vsel %vm2242, %v2236, %v982
        %v2286 = vsel %vm2242, %v2237, %v984
        %v2287 = vsel %vm2242, %v2238, %v986
        %v2288 = vsel %vm2242, %v2239, %v988
        %v2289 = vsel %vm2242, %v2240, %v990
        %v2290 = vsel %vm2242, %v2241, %v992
        %vm2291 = vcmask 97280
        %v2292 = vsel %vm2291, %v2243, %v1090
        %v2293 = vsel %vm2291, %v2244, %v1092
        %v2294 = vsel %vm2291, %v2245, %v1094
        %v2295 = vsel %vm2291, %v2246, %v1096
        %v2296 = vsel %vm2291, %v2247, %v1098
        %v2297 = vsel %vm2291, %v2248, %v1100
        %v2298 = vsel %vm2291, %v2249, %v1102
        %v2299 = vsel %vm2291, %v2250, %v1104
        %v2300 = vsel %vm2291, %v2251, %v1106
        %v2301 = vsel %vm2291, %v2252, %v1108
        %v2302 = vsel %vm2291, %v2253, %v1110
        %v2303 = vsel %vm2291, %v2254, %v1112
        %v2304 = vsel %vm2291, %v2255, %v1114
        %v2305 = vsel %vm2291, %v2256, %v1116
        %v2306 = vsel %vm2291, %v2257, %v1118
        %v2307 = vsel %vm2291, %v2258, %v1120
        %v2308 = vsel %vm2291, %v2259, %v1122
        %v2309 = vsel %vm2291, %v2260, %v1124
        %v2310 = vsel %vm2291, %v2261, %v1126
        %v2311 = vsel %vm2291, %v2262, %v1128
        %v2312 = vsel %vm2291, %v2263, %v1130
        %v2313 = vsel %vm2291, %v2264, %v1132
        %v2314 = vsel %vm2291, %v2265, %v1134
        %v2315 = vsel %vm2291, %v2266, %v1136
        %v2316 = vsel %vm2291, %v2267, %v1138
        %v2317 = vsel %vm2291, %v2268, %v1140
        %v2318 = vsel %vm2291, %v2269, %v1142
        %v2319 = vsel %vm2291, %v2270, %v1144
        %v2320 = vsel %vm2291, %v2271, %v1146
        %v2321 = vsel %vm2291, %v2272, %v1148
        %v2322 = vsel %vm2291, %v2273, %v1150
        %v2323 = vsel %vm2291, %v2274, %v1152
        %v2324 = vsel %vm2291, %v2275, %v1154
        %v2325 = vsel %vm2291, %v2276, %v1156
        %v2326 = vsel %vm2291, %v2277, %v1158
        %v2327 = vsel %vm2291, %v2278, %v1160
        %v2328 = vsel %vm2291, %v2279, %v1162
        %v2329 = vsel %vm2291, %v2280, %v1164
        %v2330 = vsel %vm2291, %v2281, %v1166
        %v2331 = vsel %vm2291, %v2282, %v1168
        %v2332 = vsel %vm2291, %v2283, %v1170
        %v2333 = vsel %vm2291, %v2284, %v1172
        %v2334 = vsel %vm2291, %v2285, %v1174
        %v2335 = vsel %vm2291, %v2286, %v1176
        %v2336 = vsel %vm2291, %v2287, %v1178
        %v2337 = vsel %vm2291, %v2288, %v1180
        %v2338 = vsel %vm2291, %v2289, %v1182
        %v2339 = vsel %vm2291, %v2290, %v1184
        %vm2340 = vcmask 130048
        %v2341 = vsel %vm2340, %v2292, %v1282
        %v2342 = vsel %vm2340, %v2293, %v1284
        %v2343 = vsel %vm2340, %v2294, %v1286
        %v2344 = vsel %vm2340, %v2295, %v1288
        %v2345 = vsel %vm2340, %v2296, %v1290
        %v2346 = vsel %vm2340, %v2297, %v1292
        %v2347 = vsel %vm2340, %v2298, %v1294
        %v2348 = vsel %vm2340, %v2299, %v1296
        %v2349 = vsel %vm2340, %v2300, %v1298
        %v2350 = vsel %vm2340, %v2301, %v1300
        %v2351 = vsel %vm2340, %v2302, %v1302
        %v2352 = vsel %vm2340, %v2303, %v1304
        %v2353 = vsel %vm2340, %v2304, %v1306
        %v2354 = vsel %vm2340, %v2305, %v1308
        %v2355 = vsel %vm2340, %v2306, %v1310
        %v2356 = vsel %vm2340, %v2307, %v1312
        %v2357 = vsel %vm2340, %v2308, %v1314
        %v2358 = vsel %vm2340, %v2309, %v1316
        %v2359 = vsel %vm2340, %v2310, %v1318
        %v2360 = vsel %vm2340, %v2311, %v1320
        %v2361 = vsel %vm2340, %v2312, %v1322
        %v2362 = vsel %vm2340, %v2313, %v1324
        %v2363 = vsel %vm2340, %v2314, %v1326
        %v2364 = vsel %vm2340, %v2315, %v1328
        %v2365 = vsel %vm2340, %v2316, %v1330
        %v2366 = vsel %vm2340, %v2317, %v1332
        %v2367 = vsel %vm2340, %v2318, %v1334
        %v2368 = vsel %vm2340, %v2319, %v1336
        %v2369 = vsel %vm2340, %v2320, %v1338
        %v2370 = vsel %vm2340, %v2321, %v1340
        %v2371 = vsel %vm2340, %v2322, %v1342
        %v2372 = vsel %vm2340, %v2323, %v1344
        %v2373 = vsel %vm2340, %v2324, %v1346
        %v2374 = vsel %vm2340, %v2325, %v1348
        %v2375 = vsel %vm2340, %v2326, %v1350
        %v2376 = vsel %vm2340, %v2327, %v1352
        %v2377 = vsel %vm2340, %v2328, %v1354
        %v2378 = vsel %vm2340, %v2329, %v1356
        %v2379 = vsel %vm2340, %v2330, %v1358
        %v2380 = vsel %vm2340, %v2331, %v1360
        %v2381 = vsel %vm2340, %v2332, %v1362
        %v2382 = vsel %vm2340, %v2333, %v1364
        %v2383 = vsel %vm2340, %v2334, %v1366
        %v2384 = vsel %vm2340, %v2335, %v1368
        %v2385 = vsel %vm2340, %v2336, %v1370
        %v2386 = vsel %vm2340, %v2337, %v1372
        %v2387 = vsel %vm2340, %v2338, %v1374
        %v2388 = vsel %vm2340, %v2339, %v1376
        %vm2389 = vcmask 162816
        %v2390 = vsel %vm2389, %v2341, %v1474
        %v2391 = vsel %vm2389, %v2342, %v1476
        %v2392 = vsel %vm2389, %v2343, %v1478
        %v2393 = vsel %vm2389, %v2344, %v1480
        %v2394 = vsel %vm2389, %v2345, %v1482
        %v2395 = vsel %vm2389, %v2346, %v1484
        %v2396 = vsel %vm2389, %v2347, %v1486
        %v2397 = vsel %vm2389, %v2348, %v1488
        %v2398 = vsel %vm2389, %v2349, %v1490
        %v2399 = vsel %vm2389, %v2350, %v1492
        %v2400 = vsel %vm2389, %v2351, %v1494
        %v2401 = vsel %vm2389, %v2352, %v1496
        %v2402 = vsel %vm2389, %v2353, %v1498
        %v2403 = vsel %vm2389, %v2354, %v1500
        %v2404 = vsel %vm2389, %v2355, %v1502
        %v2405 = vsel %vm2389, %v2356, %v1504
        %v2406 = vsel %vm2389, %v2357, %v1506
        %v2407 = vsel %vm2389, %v2358, %v1508
        %v2408 = vsel %vm2389, %v2359, %v1510
        %v2409 = vsel %vm2389, %v2360, %v1512
        %v2410 = vsel %vm2389, %v2361, %v1514
        %v2411 = vsel %vm2389, %v2362, %v1516
        %v2412 = vsel %vm2389, %v2363, %v1518
        %v2413 = vsel %vm2389, %v2364, %v1520
        %v2414 = vsel %vm2389, %v2365, %v1522
        %v2415 = vsel %vm2389, %v2366, %v1524
        %v2416 = vsel %vm2389, %v2367, %v1526
        %v2417 = vsel %vm2389, %v2368, %v1528
        %v2418 = vsel %vm2389, %v2369, %v1530
        %v2419 = vsel %vm2389, %v2370, %v1532
        %v2420 = vsel %vm2389, %v2371, %v1534
        %v2421 = vsel %vm2389, %v2372, %v1536
        %v2422 = vsel %vm2389, %v2373, %v1538
        %v2423 = vsel %vm2389, %v2374, %v1540
        %v2424 = vsel %vm2389, %v2375, %v1542
        %v2425 = vsel %vm2389, %v2376, %v1544
        %v2426 = vsel %vm2389, %v2377, %v1546
        %v2427 = vsel %vm2389, %v2378, %v1548
        %v2428 = vsel %vm2389, %v2379, %v1550
        %v2429 = vsel %vm2389, %v2380, %v1552
        %v2430 = vsel %vm2389, %v2381, %v1554
        %v2431 = vsel %vm2389, %v2382, %v1556
        %v2432 = vsel %vm2389, %v2383, %v1558
        %v2433 = vsel %vm2389, %v2384, %v1560
        %v2434 = vsel %vm2389, %v2385, %v1562
        %v2435 = vsel %vm2389, %v2386, %v1564
        %v2436 = vsel %vm2389, %v2387, %v1566
        %v2437 = vsel %vm2389, %v2388, %v1568
        %vm2438 = vcmask 195584
        %v2439 = vsel %vm2438, %v2390, %v1666
        %v2440 = vsel %vm2438, %v2391, %v1668
        %v2441 = vsel %vm2438, %v2392, %v1670
        %v2442 = vsel %vm2438, %v2393, %v1672
        %v2443 = vsel %vm2438, %v2394, %v1674
        %v2444 = vsel %vm2438, %v2395, %v1676
        %v2445 = vsel %vm2438, %v2396, %v1678
        %v2446 = vsel %vm2438, %v2397, %v1680
        %v2447 = vsel %vm2438, %v2398, %v1682
        %v2448 = vsel %vm2438, %v2399, %v1684
        %v2449 = vsel %vm2438, %v2400, %v1686
        %v2450 = vsel %vm2438, %v2401, %v1688
        %v2451 = vsel %vm2438, %v2402, %v1690
        %v2452 = vsel %vm2438, %v2403, %v1692
        %v2453 = vsel %vm2438, %v2404, %v1694
        %v2454 = vsel %vm2438, %v2405, %v1696
        %v2455 = vsel %vm2438, %v2406, %v1698
        %v2456 = vsel %vm2438, %v2407, %v1700
        %v2457 = vsel %vm2438, %v2408, %v1702
        %v2458 = vsel %vm2438, %v2409, %v1704
        %v2459 = vsel %vm2438, %v2410, %v1706
        %v2460 = vsel %vm2438, %v2411, %v1708
        %v2461 = vsel %vm2438, %v2412, %v1710
        %v2462 = vsel %vm2438, %v2413, %v1712
        %v2463 = vsel %vm2438, %v2414, %v1714
        %v2464 = vsel %vm2438, %v2415, %v1716
        %v2465 = vsel %vm2438, %v2416, %v1718
        %v2466 = vsel %vm2438, %v2417, %v1720
        %v2467 = vsel %vm2438, %v2418, %v1722
        %v2468 = vsel %vm2438, %v2419, %v1724
        %v2469 = vsel %vm2438, %v2420, %v1726
        %v2470 = vsel %vm2438, %v2421, %v1728
        %v2471 = vsel %vm2438, %v2422, %v1730
        %v2472 = vsel %vm2438, %v2423, %v1732
        %v2473 = vsel %vm2438, %v2424, %v1734
        %v2474 = vsel %vm2438, %v2425, %v1736
        %v2475 = vsel %vm2438, %v2426, %v1738
        %v2476 = vsel %vm2438, %v2427, %v1740
        %v2477 = vsel %vm2438, %v2428, %v1742
        %v2478 = vsel %vm2438, %v2429, %v1744
        %v2479 = vsel %vm2438, %v2430, %v1746
        %v2480 = vsel %vm2438, %v2431, %v1748
        %v2481 = vsel %vm2438, %v2432, %v1750
        %v2482 = vsel %vm2438, %v2433, %v1752
        %v2483 = vsel %vm2438, %v2434, %v1754
        %v2484 = vsel %vm2438, %v2435, %v1756
        %v2485 = vsel %vm2438, %v2436, %v1758
        %v2486 = vsel %vm2438, %v2437, %v1760
        %vm2487 = vcmask 228352
        %v2488 = vsel %vm2487, %v2439, %v1858
        %v2489 = vsel %vm2487, %v2440, %v1860
        %v2490 = vsel %vm2487, %v2441, %v1862
        %v2491 = vsel %vm2487, %v2442, %v1864
        %v2492 = vsel %vm2487, %v2443, %v1866
        %v2493 = vsel %vm2487, %v2444, %v1868
        %v2494 = vsel %vm2487, %v2445, %v1870
        %v2495 = vsel %vm2487, %v2446, %v1872
        %v2496 = vsel %vm2487, %v2447, %v1874
        %v2497 = vsel %vm2487, %v2448, %v1876
        %v2498 = vsel %vm2487, %v2449, %v1878
        %v2499 = vsel %vm2487, %v2450, %v1880
        %v2500 = vsel %vm2487, %v2451, %v1882
        %v2501 = vsel %vm2487, %v2452, %v1884
        %v2502 = vsel %vm2487, %v2453, %v1886
        %v2503 = vsel %vm2487, %v2454, %v1888
        %v2504 = vsel %vm2487, %v2455, %v1890
        %v2505 = vsel %vm2487, %v2456, %v1892
        %v2506 = vsel %vm2487, %v2457, %v1894
        %v2507 = vsel %vm2487, %v2458, %v1896
        %v2508 = vsel %vm2487, %v2459, %v1898
        %v2509 = vsel %vm2487, %v2460, %v1900
        %v2510 = vsel %vm2487, %v2461, %v1902
        %v2511 = vsel %vm2487, %v2462, %v1904
        %v2512 = vsel %vm2487, %v2463, %v1906
        %v2513 = vsel %vm2487, %v2464, %v1908
        %v2514 = vsel %vm2487, %v2465, %v1910
        %v2515 = vsel %vm2487, %v2466, %v1912
        %v2516 = vsel %vm2487, %v2467, %v1914
        %v2517 = vsel %vm2487, %v2468, %v1916
        %v2518 = vsel %vm2487, %v2469, %v1918
        %v2519 = vsel %vm2487, %v2470, %v1920
        %v2520 = vsel %vm2487, %v2471, %v1922
        %v2521 = vsel %vm2487, %v2472, %v1924
        %v2522 = vsel %vm2487, %v2473, %v1926
        %v2523 = vsel %vm2487, %v2474, %v1928
        %v2524 = vsel %vm2487, %v2475, %v1930
        %v2525 = vsel %vm2487, %v2476, %v1932
        %v2526 = vsel %vm2487, %v2477, %v1934
        %v2527 = vsel %vm2487, %v2478, %v1936
        %v2528 = vsel %vm2487, %v2479, %v1938
        %v2529 = vsel %vm2487, %v2480, %v1940
        %v2530 = vsel %vm2487, %v2481, %v1942
        %v2531 = vsel %vm2487, %v2482, %v1944
        %v2532 = vsel %vm2487, %v2483, %v1946
        %v2533 = vsel %vm2487, %v2484, %v1948
        %v2534 = vsel %vm2487, %v2485, %v1950
        %v2535 = vsel %vm2487, %v2486, %v1952
        %vm2536 = vcmask 261120
        %v2537 = vsel %vm2536, %v2488, %v2050
        %v2538 = vsel %vm2536, %v2489, %v2052
        %v2539 = vsel %vm2536, %v2490, %v2054
        %v2540 = vsel %vm2536, %v2491, %v2056
        %v2541 = vsel %vm2536, %v2492, %v2058
        %v2542 = vsel %vm2536, %v2493, %v2060
        %v2543 = vsel %vm2536, %v2494, %v2062
        %v2544 = vsel %vm2536, %v2495, %v2064
        %v2545 = vsel %vm2536, %v2496, %v2066
        %v2546 = vsel %vm2536, %v2497, %v2068
        %v2547 = vsel %vm2536, %v2498, %v2070
        %v2548 = vsel %vm2536, %v2499, %v2072
        %v2549 = vsel %vm2536, %v2500, %v2074
        %v2550 = vsel %vm2536, %v2501, %v2076
        %v2551 = vsel %vm2536, %v2502, %v2078
        %v2552 = vsel %vm2536, %v2503, %v2080
        %v2553 = vsel %vm2536, %v2504, %v2082
        %v2554 = vsel %vm2536, %v2505, %v2084
        %v2555 = vsel %vm2536, %v2506, %v2086
        %v2556 = vsel %vm2536, %v2507, %v2088
        %v2557 = vsel %vm2536, %v2508, %v2090
        %v2558 = vsel %vm2536, %v2509, %v2092
        %v2559 = vsel %vm2536, %v2510, %v2094
        %v2560 = vsel %vm2536, %v2511, %v2096
        %v2561 = vsel %vm2536, %v2512, %v2098
        %v2562 = vsel %vm2536, %v2513, %v2100
        %v2563 = vsel %vm2536, %v2514, %v2102
        %v2564 = vsel %vm2536, %v2515, %v2104
        %v2565 = vsel %vm2536, %v2516, %v2106
        %v2566 = vsel %vm2536, %v2517, %v2108
        %v2567 = vsel %vm2536, %v2518, %v2110
        %v2568 = vsel %vm2536, %v2519, %v2112
        %v2569 = vsel %vm2536, %v2520, %v2114
        %v2570 = vsel %vm2536, %v2521, %v2116
        %v2571 = vsel %vm2536, %v2522, %v2118
        %v2572 = vsel %vm2536, %v2523, %v2120
        %v2573 = vsel %vm2536, %v2524, %v2122
        %v2574 = vsel %vm2536, %v2525, %v2124
        %v2575 = vsel %vm2536, %v2526, %v2126
        %v2576 = vsel %vm2536, %v2527, %v2128
        %v2577 = vsel %vm2536, %v2528, %v2130
        %v2578 = vsel %vm2536, %v2529, %v2132
        %v2579 = vsel %vm2536, %v2530, %v2134
        %v2580 = vsel %vm2536, %v2531, %v2136
        %v2581 = vsel %vm2536, %v2532, %v2138
        %v2582 = vsel %vm2536, %v2533, %v2140
        %v2583 = vsel %vm2536, %v2534, %v2142
        %v2584 = vsel %vm2536, %v2535, %v2144
        %v2585 = vld [vmem:[%s1] sm:$0xff]
        %v2586 = vld [vmem:[%s1 + $0x8] sm:$0xff]
        %v2587 = vld [vmem:[%s1 + $0x10] sm:$0xff]
        %v2588 = vld [vmem:[%s1 + $0x18] sm:$0xff]
        %v2589 = vld [vmem:[%s1 + $0x20] sm:$0xf]
        %vm2590 = vcmask 293888
        %v2592 = vsel %vm2590, %v2537, 0
        %v2595 = vsel %vm2590, %v2538, 0
        %v2598 = vsel %vm2590, %v2539, 0
        %v2601 = vsel %vm2590, %v2540, 0
        %v2604 = vsel %vm2590, %v2541, 0
        %v2607 = vsel %vm2590, %v2542, 0
        %v2610 = vsel %vm2590, %v2543, 0
        %v2613 = vsel %vm2590, %v2544, 0
        %v2616 = vsel %vm2590, %v2545, 0
        %v2619 = vsel %vm2590, %v2546, 0
        %v2622 = vsel %vm2590, %v2547, 0
        %v2625 = vsel %vm2590, %v2548, 0
        %v2628 = vsel %vm2590, %v2549, 0
        %v2631 = vsel %vm2590, %v2550, 0
        %v2634 = vsel %vm2590, %v2551, 0
        %v2637 = vsel %vm2590, %v2552, 0
        %v2640 = vsel %vm2590, %v2553, 0
        %v2643 = vsel %vm2590, %v2554, 0
        %v2646 = vsel %vm2590, %v2555, 0
        %v2649 = vsel %vm2590, %v2556, 0
        %v2652 = vsel %vm2590, %v2557, 0
        %v2655 = vsel %vm2590, %v2558, 0
        %v2658 = vsel %vm2590, %v2559, 0
        %v2661 = vsel %vm2590, %v2560, 0
        %v2664 = vsel %vm2590, %v2561, 0
        %v2667 = vsel %vm2590, %v2562, 0
        %v2670 = vsel %vm2590, %v2563, 0
        %v2673 = vsel %vm2590, %v2564, 0
        %v2676 = vsel %vm2590, %v2565, 0
        %v2679 = vsel %vm2590, %v2566, 0
        %v2682 = vsel %vm2590, %v2567, 0
        %v2685 = vsel %vm2590, %v2568, 0
        %v2688 = vsel %vm2590, %v2569, 0
        %v2691 = vsel %vm2590, %v2570, 0
        %v2694 = vsel %vm2590, %v2571, 0
        %v2697 = vsel %vm2590, %v2572, 0
        %v2700 = vsel %vm2590, %v2573, 0
        %v2703 = vsel %vm2590, %v2574, 0
        %v2706 = vsel %vm2590, %v2575, 0
        %v2709 = vsel %vm2590, %v2576, 0
        %v2712 = vsel %vm2590, %v2577, 0
        %v2715 = vsel %vm2590, %v2578, 0
        %v2718 = vsel %vm2590, %v2579, 0
        %v2721 = vsel %vm2590, %v2580, 0
        %v2724 = vsel %vm2590, %v2581, 0
        %v2727 = vsel %vm2590, %v2582, 0
        %v2730 = vsel %vm2590, %v2583, 0
        %v2733 = vsel %vm2590, %v2584, 0
        %vm2735 = vcmask 1043456
        %v2737 = vsel %vm2735, %v2589, 0
        %2739 = vmatpush.msra.mxu0 0.0
        %2740 = vmatpush.msra.mxu0 0.0
        %2741 = vmatpush.msra.mxu0 0.0
        %2742 = vmatpush.msra.mxu0 0.0
        %2743 = vmatpush.msra.mxu0 0.0
        %2744 = vmatpush.msra.mxu0 0.0
        %2745 = vmatpush.msra.mxu0 0.0
        %2746 = vmatpush.msra.mxu0 0.0
        %2747 = vmatpush.msra.mxu0 0.0
        %2748 = vmatpush.msra.mxu0 0.0
        %2749 = vmatpush.msra.mxu0 0.0
        %2750 = vmatpush.msra.mxu0 %v2737
        %2751 = vmatpush.msra.mxu0 %v2588
        %2752 = vmatpush.msra.mxu0 %v2587
        %2753 = vmatpush.msra.mxu0 %v2586
        %2754 = vmatpush.msra.mxu0 %v2585
        %2755 = vmatmul.f32.gmra.mxu0 %v2592
        %v2756 = vpop.f32.mrf.mxu0
        %v2757 = vadd.f32 0.0, %v2756
        %2758 = vmatmul.f32.gmra.mxu0 %v2595
        %v2759 = vpop.f32.mrf.mxu0
        %v2760 = vadd.f32 0.0, %v2759
        %2761 = vmatmul.f32.gmra.mxu0 %v2598
        %v2762 = vpop.f32.mrf.mxu0
        %v2763 = vadd.f32 0.0, %v2762
        %2764 = vmatmul.f32.gmra.mxu0 %v2601
        %v2765 = vpop.f32.mrf.mxu0
        %v2766 = vadd.f32 0.0, %v2765
        %2767 = vmatmul.f32.gmra.mxu0 %v2604
        %v2768 = vpop.f32.mrf.mxu0
        %v2769 = vadd.f32 0.0, %v2768
        %2770 = vmatmul.f32.gmra.mxu0 %v2607
        %v2771 = vpop.f32.mrf.mxu0
        %v2772 = vadd.f32 0.0, %v2771
        %2773 = vmatmul.f32.gmra.mxu0 %v2610
        %v2774 = vpop.f32.mrf.mxu0
        %v2775 = vadd.f32 0.0, %v2774
        %2776 = vmatmul.f32.gmra.mxu0 %v2613
        %v2777 = vpop.f32.mrf.mxu0
        %v2778 = vadd.f32 0.0, %v2777
        %2779 = vmatmul.f32.gmra.mxu0 %v2616
        %v2780 = vpop.f32.mrf.mxu0
        %v2781 = vadd.f32 0.0, %v2780
        %2782 = vmatmul.f32.gmra.mxu0 %v2619
        %v2783 = vpop.f32.mrf.mxu0
        %v2784 = vadd.f32 0.0, %v2783
        %2785 = vmatmul.f32.gmra.mxu0 %v2622
        %v2786 = vpop.f32.mrf.mxu0
        %v2787 = vadd.f32 0.0, %v2786
        %2788 = vmatmul.f32.gmra.mxu0 %v2625
        %v2789 = vpop.f32.mrf.mxu0
        %v2790 = vadd.f32 0.0, %v2789
        %2791 = vmatmul.f32.gmra.mxu0 %v2628
        %v2792 = vpop.f32.mrf.mxu0
        %v2793 = vadd.f32 0.0, %v2792
        %2794 = vmatmul.f32.gmra.mxu0 %v2631
        %v2795 = vpop.f32.mrf.mxu0
        %v2796 = vadd.f32 0.0, %v2795
        %2797 = vmatmul.f32.gmra.mxu0 %v2634
        %v2798 = vpop.f32.mrf.mxu0
        %v2799 = vadd.f32 0.0, %v2798
        %2800 = vmatmul.f32.gmra.mxu0 %v2637
        %v2801 = vpop.f32.mrf.mxu0
        %v2802 = vadd.f32 0.0, %v2801
        %2803 = vmatmul.f32.gmra.mxu0 %v2640
        %v2804 = vpop.f32.mrf.mxu0
        %v2805 = vadd.f32 0.0, %v2804
        %2806 = vmatmul.f32.gmra.mxu0 %v2643
        %v2807 = vpop.f32.mrf.mxu0
        %v2808 = vadd.f32 0.0, %v2807
        %2809 = vmatmul.f32.gmra.mxu0 %v2646
        %v2810 = vpop.f32.mrf.mxu0
        %v2811 = vadd.f32 0.0, %v2810
        %2812 = vmatmul.f32.gmra.mxu0 %v2649
        %v2813 = vpop.f32.mrf.mxu0
        %v2814 = vadd.f32 0.0, %v2813
        %2815 = vmatmul.f32.gmra.mxu0 %v2652
        %v2816 = vpop.f32.mrf.mxu0
        %v2817 = vadd.f32 0.0, %v2816
        %2818 = vmatmul.f32.gmra.mxu0 %v2655
        %v2819 = vpop.f32.mrf.mxu0
        %v2820 = vadd.f32 0.0, %v2819
        %2821 = vmatmul.f32.gmra.mxu0 %v2658
        %v2822 = vpop.f32.mrf.mxu0
        %v2823 = vadd.f32 0.0, %v2822
        %2824 = vmatmul.f32.gmra.mxu0 %v2661
        %v2825 = vpop.f32.mrf.mxu0
        %v2826 = vadd.f32 0.0, %v2825
        %2827 = vmatmul.f32.gmra.mxu0 %v2664
        %v2828 = vpop.f32.mrf.mxu0
        %v2829 = vadd.f32 0.0, %v2828
        %2830 = vmatmul.f32.gmra.mxu0 %v2667
        %v2831 = vpop.f32.mrf.mxu0
        %v2832 = vadd.f32 0.0, %v2831
        %2833 = vmatmul.f32.gmra.mxu0 %v2670
        %v2834 = vpop.f32.mrf.mxu0
        %v2835 = vadd.f32 0.0, %v2834
        %2836 = vmatmul.f32.gmra.mxu0 %v2673
        %v2837 = vpop.f32.mrf.mxu0
        %v2838 = vadd.f32 0.0, %v2837
        %2839 = vmatmul.f32.gmra.mxu0 %v2676
        %v2840 = vpop.f32.mrf.mxu0
        %v2841 = vadd.f32 0.0, %v2840
        %2842 = vmatmul.f32.gmra.mxu0 %v2679
        %v2843 = vpop.f32.mrf.mxu0
        %v2844 = vadd.f32 0.0, %v2843
        %2845 = vmatmul.f32.gmra.mxu0 %v2682
        %v2846 = vpop.f32.mrf.mxu0
        %v2847 = vadd.f32 0.0, %v2846
        %2848 = vmatmul.f32.gmra.mxu0 %v2685
        %v2849 = vpop.f32.mrf.mxu0
        %v2850 = vadd.f32 0.0, %v2849
        %2851 = vmatmul.f32.gmra.mxu0 %v2688
        %v2852 = vpop.f32.mrf.mxu0
        %v2853 = vadd.f32 0.0, %v2852
        %2854 = vmatmul.f32.gmra.mxu0 %v2691
        %v2855 = vpop.f32.mrf.mxu0
        %v2856 = vadd.f32 0.0, %v2855
        %2857 = vmatmul.f32.gmra.mxu0 %v2694
        %v2858 = vpop.f32.mrf.mxu0
        %v2859 = vadd.f32 0.0, %v2858
        %2860 = vmatmul.f32.gmra.mxu0 %v2697
        %v2861 = vpop.f32.mrf.mxu0
        %v2862 = vadd.f32 0.0, %v2861
        %2863 = vmatmul.f32.gmra.mxu0 %v2700
        %v2864 = vpop.f32.mrf.mxu0
        %v2865 = vadd.f32 0.0, %v2864
        %2866 = vmatmul.f32.gmra.mxu0 %v2703
        %v2867 = vpop.f32.mrf.mxu0
        %v2868 = vadd.f32 0.0, %v2867
        %2869 = vmatmul.f32.gmra.mxu0 %v2706
        %v2870 = vpop.f32.mrf.mxu0
        %v2871 = vadd.f32 0.0, %v2870
        %2872 = vmatmul.f32.gmra.mxu0 %v2709
        %v2873 = vpop.f32.mrf.mxu0
        %v2874 = vadd.f32 0.0, %v2873
        %2875 = vmatmul.f32.gmra.mxu0 %v2712
        %v2876 = vpop.f32.mrf.mxu0
        %v2877 = vadd.f32 0.0, %v2876
        %2878 = vmatmul.f32.gmra.mxu0 %v2715
        %v2879 = vpop.f32.mrf.mxu0
        %v2880 = vadd.f32 0.0, %v2879
        %2881 = vmatmul.f32.gmra.mxu0 %v2718
        %v2882 = vpop.f32.mrf.mxu0
        %v2883 = vadd.f32 0.0, %v2882
        %2884 = vmatmul.f32.gmra.mxu0 %v2721
        %v2885 = vpop.f32.mrf.mxu0
        %v2886 = vadd.f32 0.0, %v2885
        %2887 = vmatmul.f32.gmra.mxu0 %v2724
        %v2888 = vpop.f32.mrf.mxu0
        %v2889 = vadd.f32 0.0, %v2888
        %2890 = vmatmul.f32.gmra.mxu0 %v2727
        %v2891 = vpop.f32.mrf.mxu0
        %v2892 = vadd.f32 0.0, %v2891
        %2893 = vmatmul.f32.gmra.mxu0 %v2730
        %v2894 = vpop.f32.mrf.mxu0
        %v2895 = vadd.f32 0.0, %v2894
        %2896 = vmatmul.f32.gmra.mxu0 %v2733
        %v2897 = vpop.f32.mrf.mxu0
        %v2898 = vadd.f32 0.0, %v2897
        %2899 = vdwg.mxu0
        %2900 = vst [vmem:[%s193] sm:$0xff] %v2757
        %2901 = vst [vmem:[%s193 + $0x8] sm:$0xff] %v2760
        %2902 = vst [vmem:[%s193 + $0x10] sm:$0xff] %v2763
        %2903 = vst [vmem:[%s193 + $0x18] sm:$0xff] %v2766
        %2904 = vst [vmem:[%s193 + $0x20] sm:$0xff] %v2769
        %2905 = vst [vmem:[%s193 + $0x28] sm:$0xff] %v2772
        %2906 = vst [vmem:[%s193 + $0x30] sm:$0xff] %v2775
        %2907 = vst [vmem:[%s193 + $0x38] sm:$0xff] %v2778
        %2908 = vst [vmem:[%s193 + $0x40] sm:$0xff] %v2781
        %2909 = vst [vmem:[%s193 + $0x48] sm:$0xff] %v2784
        %2910 = vst [vmem:[%s193 + $0x50] sm:$0xff] %v2787
        %2911 = vst [vmem:[%s193 + $0x58] sm:$0xff] %v2790
        %2912 = vst [vmem:[%s193 + $0x60] sm:$0xff] %v2793
        %2913 = vst [vmem:[%s193 + $0x68] sm:$0xff] %v2796
        %2914 = vst [vmem:[%s193 + $0x70] sm:$0xff] %v2799
        %2915 = vst [vmem:[%s193 + $0x78] sm:$0xff] %v2802
        %2916 = vst [vmem:[%s193 + $0x80] sm:$0xff] %v2805
        %2917 = vst [vmem:[%s193 + $0x88] sm:$0xff] %v2808
        %2918 = vst [vmem:[%s193 + $0x90] sm:$0xff] %v2811
        %2919 = vst [vmem:[%s193 + $0x98] sm:$0xff] %v2814
        %2920 = vst [vmem:[%s193 + $0xa0] sm:$0xff] %v2817
        %2921 = vst [vmem:[%s193 + $0xa8] sm:$0xff] %v2820
        %2922 = vst [vmem:[%s193 + $0xb0] sm:$0xff] %v2823
        %2923 = vst [vmem:[%s193 + $0xb8] sm:$0xff] %v2826
        %2924 = vst [vmem:[%s193 + $0xc0] sm:$0xff] %v2829
        %2925 = vst [vmem:[%s193 + $0xc8] sm:$0xff] %v2832
        %2926 = vst [vmem:[%s193 + $0xd0] sm:$0xff] %v2835
        %2927 = vst [vmem:[%s193 + $0xd8] sm:$0xff] %v2838
        %2928 = vst [vmem:[%s193 + $0xe0] sm:$0xff] %v2841
        %2929 = vst [vmem:[%s193 + $0xe8] sm:$0xff] %v2844
        %2930 = vst [vmem:[%s193 + $0xf0] sm:$0xff] %v2847
        %2931 = vst [vmem:[%s193 + $0xf8] sm:$0xff] %v2850
        %2932 = vst [vmem:[%s193 + $0x100] sm:$0xff] %v2853
        %2933 = vst [vmem:[%s193 + $0x108] sm:$0xff] %v2856
        %2934 = vst [vmem:[%s193 + $0x110] sm:$0xff] %v2859
        %2935 = vst [vmem:[%s193 + $0x118] sm:$0xff] %v2862
        %2936 = vst [vmem:[%s193 + $0x120] sm:$0xff] %v2865
        %2937 = vst [vmem:[%s193 + $0x128] sm:$0xff] %v2868
        %2938 = vst [vmem:[%s193 + $0x130] sm:$0xff] %v2871
        %2939 = vst [vmem:[%s193 + $0x138] sm:$0xff] %v2874
        %2940 = vst [vmem:[%s193 + $0x140] sm:$0xff] %v2877
        %2941 = vst [vmem:[%s193 + $0x148] sm:$0xff] %v2880
        %2942 = vst [vmem:[%s193 + $0x150] sm:$0xff] %v2883
        %2943 = vst [vmem:[%s193 + $0x158] sm:$0xff] %v2886
        %2944 = vst [vmem:[%s193 + $0x160] sm:$0xff] %v2889
        %2945 = vst [vmem:[%s193 + $0x168] sm:$0xff] %v2892
        %2946 = vst [vmem:[%s193 + $0x170] sm:$0xff] %v2895
        %2947 = vst [vmem:[%s193 + $0x178] sm:$0xff] %v2898
        %v2948 = vld [vmem:[%s204] sm:$0x7]
        %v2950 = vperm.slane %v2948, 0
        %v2951 = vperm.slane %v2948, 1
        %v2952 = vperm.slane %v2948, 2
        %2956 = vmatpush.msra.mxu0 %v2802
        %2957 = vmatpush.msra.mxu0 %v2799
        %2958 = vmatpush.msra.mxu0 %v2796
        %2959 = vmatpush.msra.mxu0 %v2793
        %2960 = vmatpush.msra.mxu0 %v2790
        %2961 = vmatpush.msra.mxu0 %v2787
        %2962 = vmatpush.msra.mxu0 %v2784
        %2963 = vmatpush.msra.mxu0 %v2781
        %2964 = vmatpush.msra.mxu0 %v2778
        %2965 = vmatpush.msra.mxu0 %v2775
        %2966 = vmatpush.msra.mxu0 %v2772
        %2967 = vmatpush.msra.mxu0 %v2769
        %2968 = vmatpush.msra.mxu0 %v2766
        %2969 = vmatpush.msra.mxu0 %v2763
        %2970 = vmatpush.msra.mxu0 %v2760
        %2971 = vmatpush.msra.mxu0 %v2757
        %2972 = vmatmul.f32.gmra.mxu0 %v2950
        %v2973 = vpop.f32.mrf.mxu0
        %v2974 = vadd.f32 0.0, %v2973
        %2975 = vdwg.mxu0
        %2976 = vmatpush.msra.mxu0 %v2850
        %2977 = vmatpush.msra.mxu0 %v2847
        %2978 = vmatpush.msra.mxu0 %v2844
        %2979 = vmatpush.msra.mxu0 %v2841
        %2980 = vmatpush.msra.mxu0 %v2838
        %2981 = vmatpush.msra.mxu0 %v2835
        %2982 = vmatpush.msra.mxu0 %v2832
        %2983 = vmatpush.msra.mxu0 %v2829
        %2984 = vmatpush.msra.mxu0 %v2826
        %2985 = vmatpush.msra.mxu0 %v2823
        %2986 = vmatpush.msra.mxu0 %v2820
        %2987 = vmatpush.msra.mxu0 %v2817
        %2988 = vmatpush.msra.mxu0 %v2814
        %2989 = vmatpush.msra.mxu0 %v2811
        %2990 = vmatpush.msra.mxu0 %v2808
        %2991 = vmatpush.msra.mxu0 %v2805
        %2992 = vmatmul.f32.gmra.mxu0 %v2951
        %v2993 = vpop.f32.mrf.mxu0
        %v2994 = vadd.f32 %v2974, %v2993
        %2995 = vdwg.mxu0
        %2996 = vmatpush.msra.mxu0 %v2898
        %2997 = vmatpush.msra.mxu0 %v2895
        %2998 = vmatpush.msra.mxu0 %v2892
        %2999 = vmatpush.msra.mxu0 %v2889
        %3000 = vmatpush.msra.mxu0 %v2886
        %3001 = vmatpush.msra.mxu0 %v2883
        %3002 = vmatpush.msra.mxu0 %v2880
        %3003 = vmatpush.msra.mxu0 %v2877
        %3004 = vmatpush.msra.mxu0 %v2874
        %3005 = vmatpush.msra.mxu0 %v2871
        %3006 = vmatpush.msra.mxu0 %v2868
        %3007 = vmatpush.msra.mxu0 %v2865
        %3008 = vmatpush.msra.mxu0 %v2862
        %3009 = vmatpush.msra.mxu0 %v2859
        %3010 = vmatpush.msra.mxu0 %v2856
        %3011 = vmatpush.msra.mxu0 %v2853
        %3012 = vmatmul.f32.gmra.mxu0 %v2952
        %v3013 = vpop.f32.mrf.mxu0
        %v3014 = vadd.f32 %v2994, %v3013
        %3015 = vdwg.mxu0
        %3016 = vst [vmem:[%s200] sm:$0x1] %v3014
        %v3017 = vmul.f32 %v2757, %v2757
        %v3018 = vmul.f32 %v2760, %v2760
        %v3019 = vmul.f32 %v2763, %v2763
        %v3020 = vmul.f32 %v2766, %v2766
        %v3021 = vmul.f32 %v2769, %v2769
        %v3022 = vmul.f32 %v2772, %v2772
        %v3023 = vmul.f32 %v2775, %v2775
        %v3024 = vmul.f32 %v2778, %v2778
        %v3025 = vmul.f32 %v2781, %v2781
        %v3026 = vmul.f32 %v2784, %v2784
        %v3027 = vmul.f32 %v2787, %v2787
        %v3028 = vmul.f32 %v2790, %v2790
        %v3029 = vmul.f32 %v2793, %v2793
        %v3030 = vmul.f32 %v2796, %v2796
        %v3031 = vmul.f32 %v2799, %v2799
        %v3032 = vmul.f32 %v2802, %v2802
        %v3033 = vmul.f32 %v2805, %v2805
        %v3034 = vmul.f32 %v2808, %v2808
        %v3035 = vmul.f32 %v2811, %v2811
        %v3036 = vmul.f32 %v2814, %v2814
        %v3037 = vmul.f32 %v2817, %v2817
        %v3038 = vmul.f32 %v2820, %v2820
        %v3039 = vmul.f32 %v2823, %v2823
        %v3040 = vmul.f32 %v2826, %v2826
        %v3041 = vmul.f32 %v2829, %v2829
        %v3042 = vmul.f32 %v2832, %v2832
        %v3043 = vmul.f32 %v2835, %v2835
        %v3044 = vmul.f32 %v2838, %v2838
        %v3045 = vmul.f32 %v2841, %v2841
        %v3046 = vmul.f32 %v2844, %v2844
        %v3047 = vmul.f32 %v2847, %v2847
        %v3048 = vmul.f32 %v2850, %v2850
        %v3049 = vmul.f32 %v2853, %v2853
        %v3050 = vmul.f32 %v2856, %v2856
        %v3051 = vmul.f32 %v2859, %v2859
        %v3052 = vmul.f32 %v2862, %v2862
        %v3053 = vmul.f32 %v2865, %v2865
        %v3054 = vmul.f32 %v2868, %v2868
        %v3055 = vmul.f32 %v2871, %v2871
        %v3056 = vmul.f32 %v2874, %v2874
        %v3057 = vmul.f32 %v2877, %v2877
        %v3058 = vmul.f32 %v2880, %v2880
        %v3059 = vmul.f32 %v2883, %v2883
        %v3060 = vmul.f32 %v2886, %v2886
        %v3061 = vmul.f32 %v2889, %v2889
        %v3062 = vmul.f32 %v2892, %v2892
        %v3063 = vmul.f32 %v2895, %v2895
        %v3064 = vmul.f32 %v2898, %v2898
        %3065 = vmatpush.msra.mxu0 %v3032
        %3066 = vmatpush.msra.mxu0 %v3031
        %3067 = vmatpush.msra.mxu0 %v3030
        %3068 = vmatpush.msra.mxu0 %v3029
        %3069 = vmatpush.msra.mxu0 %v3028
        %3070 = vmatpush.msra.mxu0 %v3027
        %3071 = vmatpush.msra.mxu0 %v3026
        %3072 = vmatpush.msra.mxu0 %v3025
        %3073 = vmatpush.msra.mxu0 %v3024
        %3074 = vmatpush.msra.mxu0 %v3023
        %3075 = vmatpush.msra.mxu0 %v3022
        %3076 = vmatpush.msra.mxu0 %v3021
        %3077 = vmatpush.msra.mxu0 %v3020
        %3078 = vmatpush.msra.mxu0 %v3019
        %3079 = vmatpush.msra.mxu0 %v3018
        %3080 = vmatpush.msra.mxu0 %v3017
        %3081 = vmatmul.f32.gmra.mxu0 %v2950
        %v3082 = vpop.f32.mrf.mxu0
        %v3083 = vadd.f32 0.0, %v3082
        %3084 = vdwg.mxu0
        %3085 = vmatpush.msra.mxu0 %v3048
        %3086 = vmatpush.msra.mxu0 %v3047
        %3087 = vmatpush.msra.mxu0 %v3046
        %3088 = vmatpush.msra.mxu0 %v3045
        %3089 = vmatpush.msra.mxu0 %v3044
        %3090 = vmatpush.msra.mxu0 %v3043
        %3091 = vmatpush.msra.mxu0 %v3042
        %3092 = vmatpush.msra.mxu0 %v3041
        %3093 = vmatpush.msra.mxu0 %v3040
        %3094 = vmatpush.msra.mxu0 %v3039
        %3095 = vmatpush.msra.mxu0 %v3038
        %3096 = vmatpush.msra.mxu0 %v3037
        %3097 = vmatpush.msra.mxu0 %v3036
        %3098 = vmatpush.msra.mxu0 %v3035
        %3099 = vmatpush.msra.mxu0 %v3034
        %3100 = vmatpush.msra.mxu0 %v3033
        %3101 = vmatmul.f32.gmra.mxu0 %v2951
        %v3102 = vpop.f32.mrf.mxu0
        %v3103 = vadd.f32 %v3083, %v3102
        %3104 = vdwg.mxu0
        %3105 = vmatpush.msra.mxu0 %v3064
        %3106 = vmatpush.msra.mxu0 %v3063
        %3107 = vmatpush.msra.mxu0 %v3062
        %3108 = vmatpush.msra.mxu0 %v3061
        %3109 = vmatpush.msra.mxu0 %v3060
        %3110 = vmatpush.msra.mxu0 %v3059
        %3111 = vmatpush.msra.mxu0 %v3058
        %3112 = vmatpush.msra.mxu0 %v3057
        %3113 = vmatpush.msra.mxu0 %v3056
        %3114 = vmatpush.msra.mxu0 %v3055
        %3115 = vmatpush.msra.mxu0 %v3054
        %3116 = vmatpush.msra.mxu0 %v3053
        %3117 = vmatpush.msra.mxu0 %v3052
        %3118 = vmatpush.msra.mxu0 %v3051
        %3119 = vmatpush.msra.mxu0 %v3050
        %3120 = vmatpush.msra.mxu0 %v3049
        %3121 = vmatmul.f32.gmra.mxu0 %v2952
        %v3122 = vpop.f32.mrf.mxu0
        %v3123 = vadd.f32 %v3103, %v3122
        %3124 = vdwg.mxu0
        %3125 = vst [vmem:[%s200 + $0x1] sm:$0x1] %v3123
        %s3126 = sand.u32 %s98, 1
        %s3127 = scalar_lea.sflag [#allocation3], %s3126
        %s3128 = sand.u32 %s98, 1
        %s3129 = smul.addr %s3128, 384
        %s3130 = scalar_lea.vmem [#allocation2], %s3129
        %s3131 = sand.u32 %s124, 1
        %s3132 = scalar_lea.sflag [#allocation5], %s3131
        %s3133 = sand.u32 %s124, 1
        %s3134 = smul.addr %s3133, 2
        %s3135 = scalar_lea.vmem [#allocation4], %s3134
        // Predicated region
        $region33: #{tpu_custom_call.1} parent=31 // pred_check
          %p3136 = pneg %p108
        $region34: #{tpu_custom_call.1} parent=31 // pred_check_branch
          %3138 = sbr.rel (%p3136) target = $region36
        $region35: #{tpu_custom_call.1} parent=31 // pred_region
          %s3139 = smul.u32 48, %s22
          %3141 = vsyncadd %s3127, 0
          %s3142 = smul.addr %s3139, 8
          %s3143 = scalar_lea.hbm %s3, %s3142
          %s3144 = sshll.u32 %s3130, 4
          %s3145 = int_to_ptr.vmem [resolvable:$true] %s3144
          %s3146 = sshll.u32 %s3143, 4
          %s3147 = int_to_ptr.hbm [resolvable:$true] %s3146
          %3152 = dma.vmem_to_hbm [thread:$0]  %s3145, 6144, %s3147, %s3127, 128, 128, 8
        $region36: #{tpu_custom_call.1} parent=31 // pred_fallthru
          _
        // Predicated region
        $region37: #{tpu_custom_call.1} parent=31 // pred_check
          %p3153 = pneg %p134
        $region38: #{tpu_custom_call.1} parent=31 // pred_check_branch
          %3155 = sbr.rel (%p3153) target = $region40
        $region39: #{tpu_custom_call.1} parent=31 // pred_region
          %3157 = vsyncadd %s3132, 0
          %s3158 = smul.addr %s22, 2
          %s3159 = scalar_lea.hbm %s4, %s3158
          %s3161 = sshll.u32 %s3135, 4
          %s3162 = int_to_ptr.vmem [resolvable:$true] %s3161
          %s3163 = sshll.u32 %s3159, 4
          %s3164 = int_to_ptr.hbm [resolvable:$true] %s3163
          %3166 = dma.vmem_to_hbm [thread:$0]  %s3162, 32, %s3164, %s3132
        $region40: #{tpu_custom_call.1} parent=31 // pred_fallthru
          _
      $region32: #{tpu_custom_call.1} parent=5 // pred_fallthru
        _
      %p3167 = scmp.le.s32.totalorder 2, %s17
      // Predicated region
      $region41: #{tpu_custom_call.1} parent=5 // pred_check
        %p3168 = pneg %p3167
      $region42: #{tpu_custom_call.1} parent=5 // pred_check_branch
        %3170 = sbr.rel (%p3168) target = $region44
      $region43: #{tpu_custom_call.1} parent=5 // pred_region
        %s3171 = ssub.s32 %s17, 2
        // Predicated region
        $region45: #{tpu_custom_call.1} parent=43 // pred_check
          %p3172 = pneg %p114
        $region46: #{tpu_custom_call.1} parent=43 // pred_check_branch
          %3174 = sbr.rel (%p3172) target = $region48
        $region47: #{tpu_custom_call.1} parent=43 // pred_region
          %s3175 = sand.u32 %s99, 1
          %s3176 = scalar_lea.sflag [#allocation3], %s3175
          %s3177 = sand.u32 %s99, 1
          %s3178 = smul.addr %s3177, 384
          %s3179 = scalar_lea.vmem [#allocation2], %s3178
          %3181 = dma.done %s3176, 6144
        $region48: #{tpu_custom_call.1} parent=43 // pred_fallthru
          _
        // Predicated region
        $region49: #{tpu_custom_call.1} parent=43 // pred_check
          %p3182 = pneg %p140
        $region50: #{tpu_custom_call.1} parent=43 // pred_check_branch
          %3184 = sbr.rel (%p3182) target = $region52
        $region51: #{tpu_custom_call.1} parent=43 // pred_region
          %s3185 = sand.u32 %s125, 1
          %s3186 = scalar_lea.sflag [#allocation5], %s3185
          %s3187 = sand.u32 %s125, 1
          %s3188 = smul.addr %s3187, 2
          %s3189 = scalar_lea.vmem [#allocation4], %s3188
          %3191 = dma.done %s3186, 32
        $region52: #{tpu_custom_call.1} parent=43 // pred_fallthru
          _
      $region44: #{tpu_custom_call.1} parent=5 // pred_fallthru
        _
    $region6: #{tpu_custom_call.1} parent=1 // loop_footer
      %s21 = sadd.s32 1, %s17
    $region7: #{tpu_custom_call.1} parent=1 // loop_footer_branch
      %16 = sbr.rel target = $region3
    $region8: #{tpu_custom_call.1} parent=1 // loop_exit
      _
    %3192 = vsyncpa [#allocation3], 1
    %s3193 = scalar_lea.sflag [#allocation3], 1
    %3194 = vsyncpa %s3193, 1
    %3195 = vsyncpa [#allocation5], 1
    %s3196 = scalar_lea.sflag [#allocation5], 1
    %3197 = vsyncpa %s3196, 1

</llo_original>
